<compile_context>
chip_gen: v7x
topology: tpu7x:2x2x1
jax: 0.10.0
libtpu: 0.0.40
codegen_flags: <defaults>
</compile_context>

<pallas_src>
import math
from functools import partial

import jax
import jax.numpy as jnp
from jax.experimental import pallas as pl
from jax.experimental.pallas import tpu as pltpu


def _round_up(x, m):
    return ((x + m - 1) // m) * m


def _pad_to(x, rows, cols=None, fill=0):
    r, c = x.shape
    cols = c if cols is None else cols
    if rows == r and cols == c:
        return x
    return jnp.pad(x, ((0, rows - r), (0, cols - c)), constant_values=fill)


# ---------------------------------------------------------------------------
# Kernel 1: neighbor smoothing (top-k gather reformulated as tiled on-the-fly W)
#   acc[i, :]  += W_tile(i, c) @ feature[c-tile]          (accumulated over c)
#   out[i, :]   = mask ? feature[i] : acc[i] / denom[i]   (fused finalize)
# ---------------------------------------------------------------------------
def _smooth_kernel(values_ref, idx_ref, denom_ref, feat_cols_ref,
                   feat_self_ref, mask_ref, out_ref, acc_ref, *, k, tn):
    c = pl.program_id(1)

    @pl.when(c == 0)
    def _init():
        acc_ref[...] = jnp.zeros_like(acc_ref)

    # Build this (tm, tn) slab of the sparse neighbor-weight matrix from the
    # top-k (value, index) pairs — no dense (N, N) scatter in HBM.
    vals = values_ref[...]                                   # (tm, k)  f32
    nbrs = idx_ref[...]                                      # (tm, k)  i32
    tm = vals.shape[0]
    col_ids = c * tn + jax.lax.broadcasted_iota(jnp.int32, (1, tn), 1)   # (1, tn)
    w = jnp.zeros((tm, tn), jnp.float32)
    for j in range(k):                                       # k is small & static -> unrolled
        hit = nbrs[:, j:j + 1] == col_ids                    # (tm, tn) bool
        w = w + jnp.where(hit, vals[:, j:j + 1], 0.0)

    acc_ref[...] += jnp.dot(w, feat_cols_ref[...],
                            preferred_element_type=jnp.float32)

    @pl.when(c == pl.num_programs(1) - 1)
    def _finalize():
        merged = acc_ref[...] / denom_ref[...]               # denom precomputed outside
        keep = mask_ref[...] > 0.0
        out_ref[...] = jnp.where(keep, feat_self_ref[...], merged)


def smooth_features(values, idx, denom, feature, mask_f32, *, tm=256, tn=512):
    N, D = feature.shape
    k = values.shape[1]

    Dp = _round_up(D, 128)                                   # lane-dense slabs
    tn = _round_up(min(tn, _round_up(N, 128)), 128)          # column (reduction) tile
    tm = _round_up(min(tm, tn), 8)                           # row tile
    while tn % tm:                                           # keep tm a divisor of tn
        tm -= 8
    Np = _round_up(N, tn)                                    # tm | tn | Np

    values_p = _pad_to(values.astype(jnp.float32), Np)
    idx_p = _pad_to(idx.astype(jnp.int32), Np)
    denom_p = _pad_to(denom.astype(jnp.float32), Np, fill=1.0)   # avoid 0-divide on pad rows
    feature_p = _pad_to(feature.astype(jnp.float32), Np, Dp)
    mask_p = _pad_to(mask_f32.astype(jnp.float32), Np, fill=1.0)

    grid = (Np // tm, Np // tn)                              # rows parallel, cols = reduction

    out = pl.pallas_call(
        partial(_smooth_kernel, k=k, tn=tn),
        out_shape=jax.ShapeDtypeStruct((Np, Dp), jnp.float32),
        grid=grid,
        in_specs=[
            pl.BlockSpec((tm, k), lambda i, c: (i, 0)),      # top-k values
            pl.BlockSpec((tm, k), lambda i, c: (i, 0)),      # top-k indices
            pl.BlockSpec((tm, 1), lambda i, c: (i, 0)),      # precomputed row denominators
            pl.BlockSpec((tn, Dp), lambda i, c: (c, 0)),     # feature as neighbor columns
            pl.BlockSpec((tm, Dp), lambda i, c: (i, 0)),     # feature as self rows
            pl.BlockSpec((tm, 1), lambda i, c: (i, 0)),      # mask
        ],
        out_specs=pl.BlockSpec((tm, Dp), lambda i, c: (i, 0)),
        scratch_shapes=[pltpu.VMEM((tm, Dp), jnp.float32)],
        compiler_params=pltpu.CompilerParams(
            dimension_semantics=("parallel", "arbitrary"),
            vmem_limit_bytes=64 * 1024 * 1024),
        cost_estimate=pl.CostEstimate(
            flops=2 * Np * Np * Dp + 3 * k * Np * Np,
            transcendentals=0,
            bytes_accessed=4 * (2 * Np * k + 3 * Np
                                + (Np // tm) * Np * Dp + 2 * Np * Dp)),
    )(values_p, idx_p, denom_p, feature_p, feature_p, mask_p)

    return out[:N, :D]


# ---------------------------------------------------------------------------
# Kernel 2: decoder hot path  outputs = sigmoid(u @ v.T), tiled over the output
# ---------------------------------------------------------------------------
def _decode_kernel(u_ref, v_ref, out_ref):
    # Contract on the (shared, last) feature axis — no explicit transpose of v.
    x = jax.lax.dot_general(u_ref[...], v_ref[...],
                            dimension_numbers=(((1,), (1,)), ((), ())),
                            preferred_element_type=jnp.float32)
    out_ref[...] = jax.nn.sigmoid(x)


def decode(u, v, *, tm=256, tn=256):
    su, D = u.shape
    sv, _ = v.shape
    Dp = _round_up(D, 128)
    tm = _round_up(min(tm, _round_up(su, 8)), 8)
    tn = _round_up(min(tn, _round_up(sv, 128)), 128)
    su_p = _round_up(su, tm)
    sv_p = _round_up(sv, tn)

    u_p = _pad_to(u.astype(jnp.float32), su_p, Dp)
    v_p = _pad_to(v.astype(jnp.float32), sv_p, Dp)

    grid = (su_p // tm, sv_p // tn)
    out = pl.pallas_call(
        _decode_kernel,
        out_shape=jax.ShapeDtypeStruct((su_p, sv_p), jnp.float32),
        grid=grid,
        in_specs=[
            pl.BlockSpec((tm, Dp), lambda i, j: (i, 0)),
            pl.BlockSpec((tn, Dp), lambda i, j: (j, 0)),
        ],
        out_specs=pl.BlockSpec((tm, tn), lambda i, j: (i, j)),
        compiler_params=pltpu.CompilerParams(
            dimension_semantics=("parallel", "parallel"),
            vmem_limit_bytes=64 * 1024 * 1024),
        cost_estimate=pl.CostEstimate(
            flops=2 * su_p * sv_p * Dp,
            transcendentals=su_p * sv_p,
            bytes_accessed=4 * (su_p * Dp + sv_p * Dp + su_p * sv_p)),
    )(u_p, v_p)
    return out[:su, :sv]


# ---------------------------------------------------------------------------
# Full forward (inference path of SmoothDecoder.forward)
# ---------------------------------------------------------------------------
def smooth_decoder_forward(u, v, sim, mask_bool, k,
                           *, smooth_tiles=(256, 512), decode_tiles=(256, 256)):
    size_u = u.shape[0]
    feature = jnp.concatenate([u, v], axis=0).astype(jnp.float32)   # (N, D)
    N = feature.shape[0]
    if k < 0:
        k = N
    # top-k neighbor selection (glue) — keep the (N, k) sparse form; no dense (N, N) W.
    values, idx = jax.lax.top_k(sim, k)                             # (N, k)
    values = values.astype(jnp.float32)
    denom = values.sum(axis=1, keepdims=True)                       # (N, 1) row-sum of top-k
    mask_f = mask_bool.astype(jnp.float32).reshape(N, 1)

    feature = smooth_features(values, idx, denom, feature, mask_f,
                              tm=smooth_tiles[0], tn=smooth_tiles[1])
    u_new = feature[:size_u]
    v_new = feature[size_u:]
    # TODO(synk): smoothing and decode could be fused into one pallas_call to skip a full
    # HBM round-trip of `feature`; kept separate since decode needs every row tile of u/v.
    outputs = decode(u_new, v_new, tm=decode_tiles[0], tn=decode_tiles[1])
    return outputs, u_new, v_new


# Pure-JAX reference of the PyTorch semantics (silent sanity check).
def _reference(u, v, sim, mask_bool, k):
    size_u = u.shape[0]
    feature = jnp.concatenate([u, v], axis=0)
    N = feature.shape[0]
    value, idx = jax.lax.top_k(sim, k)                              # (N, k)
    gathered = feature[idx.reshape(-1)].reshape(N, k, -1) * value[:, :, None]
    merged = gathered.sum(axis=1) / value.sum(axis=1, keepdims=True)
    feature = jnp.where(mask_bool.reshape(N, 1), feature, merged)
    u_n = feature[:size_u]
    v_n = feature[size_u:]
    x = u_n @ v_n.T
    return jax.nn.sigmoid(x), u_n, v_n


if __name__ == "__main__":
    size_u, size_v, D, k = 96, 64, 32, 8
    N = size_u + size_v

    key = jax.random.PRNGKey(0)
    ku, kv, ks, km = jax.random.split(key, 4)

    u = jax.random.normal(ku, (size_u, D), dtype=jnp.float32)
    v = jax.random.normal(kv, (size_v, D), dtype=jnp.float32)

    # deterministic "buffers": symmetric nonnegative similarity, boolean mask
    sim_raw = jax.random.uniform(ks, (N, N), dtype=jnp.float32)
    sim = 0.5 * (sim_raw + sim_raw.T)
    mask_bool = jax.random.bernoulli(km, p=0.5, shape=(N, 1))

    # small tiles so the toy shapes still exercise the multi-tile / reduction-accumulator path
    outputs, u_new, v_new = smooth_decoder_forward(
        u, v, sim, mask_bool, k, smooth_tiles=(64, 128), decode_tiles=(32, 128))
    outputs = jax.block_until_ready(outputs)
    u_new = jax.block_until_ready(u_new)
    v_new = jax.block_until_ready(v_new)

    ref_out, ref_u, ref_v = _reference(u, v, sim, mask_bool, k)
    assert jnp.allclose(outputs, ref_out, atol=1e-5, rtol=1e-5)
    assert jnp.allclose(u_new, ref_u, atol=1e-5, rtol=1e-5)
    assert jnp.allclose(v_new, ref_v, atol=1e-5, rtol=1e-5)

    # TODO(synk): the first-call sparse-COO buffer construction / training-mask branch is
    # host-side state setup in PyTorch, not a compute hot path; it is emulated as inputs here.
    print("KERNEL_OK")
</pallas_src>

<mosaic_0001>
module attributes {stable_mosaic.version = 11 : i64} {
  func.func @_smooth_kernel(%arg0: i32, %arg1: i32, %arg2: memref<64x8xf32, #tpu.memory_space<vmem>>, %arg3: memref<64x8xi32, #tpu.memory_space<vmem>>, %arg4: memref<64x1xf32, #tpu.memory_space<vmem>>, %arg5: memref<128x128xf32, #tpu.memory_space<vmem>>, %arg6: memref<64x128xf32, #tpu.memory_space<vmem>>, %arg7: memref<64x1xf32, #tpu.memory_space<vmem>>, %arg8: memref<64x128xf32, #tpu.memory_space<vmem>>, %arg9: memref<64x128xf32, #tpu.memory_space<vmem>>) attributes {dimension_semantics = [#tpu.dimension_semantics<parallel>, #tpu.dimension_semantics<arbitrary>], iteration_bounds = array<i64: 4, 2>, scalar_prefetch = 0 : i64, scratch_operands = 1 : i64, tpu.core_type = #tpu.core_type<tc>, window_params = [{transform_indices = @transform_0, window_bounds = array<i64: 64, 8>}, {transform_indices = @transform_1, window_bounds = array<i64: 64, 8>}, {transform_indices = @transform_2, window_bounds = array<i64: 64, 1>}, {transform_indices = @transform_3, window_bounds = array<i64: 128, 128>}, {transform_indices = @transform_4, window_bounds = array<i64: 64, 128>}, {transform_indices = @transform_5, window_bounds = array<i64: 64, 1>}, {transform_indices = @transform_6, window_bounds = array<i64: 64, 128>}]} {
    %c0_i32 = arith.constant 0 : i32
    %0 = arith.cmpi eq, %arg1, %c0_i32 : i32
    %1 = arith.extui %0 : i1 to i32
    %c0_i32_0 = arith.constant 0 : i32
    %2 = arith.cmpi ne, %1, %c0_i32_0 : i32
    scf.if %2 {
      %cst_20 = arith.constant 0.000000e+00 : f32
      %98 = vector.broadcast %cst_20 : f32 to vector<64x128xf32>
      %c0_21 = arith.constant 0 : index
      %c0_22 = arith.constant 0 : index
      %99 = vector.load %arg9[%c0_21, %c0_22] : memref<64x128xf32, #tpu.memory_space<vmem>>, vector<64x128xf32>
      tpu.vector_store %arg9[%c0_21, %c0_22], %98 {strides = array<i32>} : memref<64x128xf32, #tpu.memory_space<vmem>>, vector<64x128xf32>,
    } else {
    }
    %c0 = arith.constant 0 : index
    %c0_1 = arith.constant 0 : index
    %3 = vector.load %arg2[%c0, %c0_1] : memref<64x8xf32, #tpu.memory_space<vmem>>, vector<64x8xf32>
    %c0_2 = arith.constant 0 : index
    %c0_3 = arith.constant 0 : index
    %4 = vector.load %arg3[%c0_2, %c0_3] : memref<64x8xi32, #tpu.memory_space<vmem>>, vector<64x8xi32>
    %c128_i32 = arith.constant 128 : i32
    %5 = arith.muli %arg1, %c128_i32 : i32
    %6 = tpu.iota {dimensions = array<i32: 1>} : vector<1x128xi32>
    %7 = vector.broadcast %5 : i32 to vector<1x128xi32>
    %8 = arith.addi %7, %6 : vector<1x128xi32>
    %cst = arith.constant 0.000000e+00 : f32
    %9 = vector.broadcast %cst : f32 to vector<64x128xf32>
    %10 = vector.extract_strided_slice %4 {offsets = [0, 0], sizes = [64, 1], strides = [1, 1]} : vector<64x8xi32> to vector<64x1xi32>
    %11 = vector.broadcast %10 : vector<64x1xi32> to vector<64x128xi32>
    %12 = vector.broadcast %8 : vector<1x128xi32> to vector<64x128xi32>
    %13 = arith.cmpi eq, %11, %12 : vector<64x128xi32>
    %14 = vector.extract_strided_slice %3 {offsets = [0, 0], sizes = [64, 1], strides = [1, 1]} : vector<64x8xf32> to vector<64x1xf32>
    %cst_4 = arith.constant 0.000000e+00 : f32
    %15 = vector.shape_cast %14 : vector<64x1xf32> to vector<64x1xf32>
    %16 = vector.broadcast %15 : vector<64x1xf32> to vector<64x128xf32>
    %17 = vector.broadcast %cst_4 : f32 to vector<64x128xf32>
    %18 = arith.select %13, %16, %17 : vector<64x128xi1>, vector<64x128xf32>
    %19 = arith.addf %9, %18 : vector<64x128xf32>
    %20 = vector.extract_strided_slice %4 {offsets = [0, 1], sizes = [64, 1], strides = [1, 1]} : vector<64x8xi32> to vector<64x1xi32>
    %21 = vector.broadcast %20 : vector<64x1xi32> to vector<64x128xi32>
    %22 = vector.broadcast %8 : vector<1x128xi32> to vector<64x128xi32>
    %23 = arith.cmpi eq, %21, %22 : vector<64x128xi32>
    %24 = vector.extract_strided_slice %3 {offsets = [0, 1], sizes = [64, 1], strides = [1, 1]} : vector<64x8xf32> to vector<64x1xf32>
    %cst_5 = arith.constant 0.000000e+00 : f32
    %25 = vector.shape_cast %24 : vector<64x1xf32> to vector<64x1xf32>
    %26 = vector.broadcast %25 : vector<64x1xf32> to vector<64x128xf32>
    %27 = vector.broadcast %cst_5 : f32 to vector<64x128xf32>
    %28 = arith.select %23, %26, %27 : vector<64x128xi1>, vector<64x128xf32>
    %29 = arith.addf %19, %28 : vector<64x128xf32>
    %30 = vector.extract_strided_slice %4 {offsets = [0, 2], sizes = [64, 1], strides = [1, 1]} : vector<64x8xi32> to vector<64x1xi32>
    %31 = vector.broadcast %30 : vector<64x1xi32> to vector<64x128xi32>
    %32 = vector.broadcast %8 : vector<1x128xi32> to vector<64x128xi32>
    %33 = arith.cmpi eq, %31, %32 : vector<64x128xi32>
    %34 = vector.extract_strided_slice %3 {offsets = [0, 2], sizes = [64, 1], strides = [1, 1]} : vector<64x8xf32> to vector<64x1xf32>
    %cst_6 = arith.constant 0.000000e+00 : f32
    %35 = vector.shape_cast %34 : vector<64x1xf32> to vector<64x1xf32>
    %36 = vector.broadcast %35 : vector<64x1xf32> to vector<64x128xf32>
    %37 = vector.broadcast %cst_6 : f32 to vector<64x128xf32>
    %38 = arith.select %33, %36, %37 : vector<64x128xi1>, vector<64x128xf32>
    %39 = arith.addf %29, %38 : vector<64x128xf32>
    %40 = vector.extract_strided_slice %4 {offsets = [0, 3], sizes = [64, 1], strides = [1, 1]} : vector<64x8xi32> to vector<64x1xi32>
    %41 = vector.broadcast %40 : vector<64x1xi32> to vector<64x128xi32>
    %42 = vector.broadcast %8 : vector<1x128xi32> to vector<64x128xi32>
    %43 = arith.cmpi eq, %41, %42 : vector<64x128xi32>
    %44 = vector.extract_strided_slice %3 {offsets = [0, 3], sizes = [64, 1], strides = [1, 1]} : vector<64x8xf32> to vector<64x1xf32>
    %cst_7 = arith.constant 0.000000e+00 : f32
    %45 = vector.shape_cast %44 : vector<64x1xf32> to vector<64x1xf32>
    %46 = vector.broadcast %45 : vector<64x1xf32> to vector<64x128xf32>
    %47 = vector.broadcast %cst_7 : f32 to vector<64x128xf32>
    %48 = arith.select %43, %46, %47 : vector<64x128xi1>, vector<64x128xf32>
    %49 = arith.addf %39, %48 : vector<64x128xf32>
    %50 = vector.extract_strided_slice %4 {offsets = [0, 4], sizes = [64, 1], strides = [1, 1]} : vector<64x8xi32> to vector<64x1xi32>
    %51 = vector.broadcast %50 : vector<64x1xi32> to vector<64x128xi32>
    %52 = vector.broadcast %8 : vector<1x128xi32> to vector<64x128xi32>
    %53 = arith.cmpi eq, %51, %52 : vector<64x128xi32>
    %54 = vector.extract_strided_slice %3 {offsets = [0, 4], sizes = [64, 1], strides = [1, 1]} : vector<64x8xf32> to vector<64x1xf32>
    %cst_8 = arith.constant 0.000000e+00 : f32
    %55 = vector.shape_cast %54 : vector<64x1xf32> to vector<64x1xf32>
    %56 = vector.broadcast %55 : vector<64x1xf32> to vector<64x128xf32>
    %57 = vector.broadcast %cst_8 : f32 to vector<64x128xf32>
    %58 = arith.select %53, %56, %57 : vector<64x128xi1>, vector<64x128xf32>
    %59 = arith.addf %49, %58 : vector<64x128xf32>
    %60 = vector.extract_strided_slice %4 {offsets = [0, 5], sizes = [64, 1], strides = [1, 1]} : vector<64x8xi32> to vector<64x1xi32>
    %61 = vector.broadcast %60 : vector<64x1xi32> to vector<64x128xi32>
    %62 = vector.broadcast %8 : vector<1x128xi32> to vector<64x128xi32>
    %63 = arith.cmpi eq, %61, %62 : vector<64x128xi32>
    %64 = vector.extract_strided_slice %3 {offsets = [0, 5], sizes = [64, 1], strides = [1, 1]} : vector<64x8xf32> to vector<64x1xf32>
    %cst_9 = arith.constant 0.000000e+00 : f32
    %65 = vector.shape_cast %64 : vector<64x1xf32> to vector<64x1xf32>
    %66 = vector.broadcast %65 : vector<64x1xf32> to vector<64x128xf32>
    %67 = vector.broadcast %cst_9 : f32 to vector<64x128xf32>
    %68 = arith.select %63, %66, %67 : vector<64x128xi1>, vector<64x128xf32>
    %69 = arith.addf %59, %68 : vector<64x128xf32>
    %70 = vector.extract_strided_slice %4 {offsets = [0, 6], sizes = [64, 1], strides = [1, 1]} : vector<64x8xi32> to vector<64x1xi32>
    %71 = vector.broadcast %70 : vector<64x1xi32> to vector<64x128xi32>
    %72 = vector.broadcast %8 : vector<1x128xi32> to vector<64x128xi32>
    %73 = arith.cmpi eq, %71, %72 : vector<64x128xi32>
    %74 = vector.extract_strided_slice %3 {offsets = [0, 6], sizes = [64, 1], strides = [1, 1]} : vector<64x8xf32> to vector<64x1xf32>
    %cst_10 = arith.constant 0.000000e+00 : f32
    %75 = vector.shape_cast %74 : vector<64x1xf32> to vector<64x1xf32>
    %76 = vector.broadcast %75 : vector<64x1xf32> to vector<64x128xf32>
    %77 = vector.broadcast %cst_10 : f32 to vector<64x128xf32>
    %78 = arith.select %73, %76, %77 : vector<64x128xi1>, vector<64x128xf32>
    %79 = arith.addf %69, %78 : vector<64x128xf32>
    %80 = vector.extract_strided_slice %4 {offsets = [0, 7], sizes = [64, 1], strides = [1, 1]} : vector<64x8xi32> to vector<64x1xi32>
    %81 = vector.broadcast %80 : vector<64x1xi32> to vector<64x128xi32>
    %82 = vector.broadcast %8 : vector<1x128xi32> to vector<64x128xi32>
    %83 = arith.cmpi eq, %81, %82 : vector<64x128xi32>
    %84 = vector.extract_strided_slice %3 {offsets = [0, 7], sizes = [64, 1], strides = [1, 1]} : vector<64x8xf32> to vector<64x1xf32>
    %cst_11 = arith.constant 0.000000e+00 : f32
    %85 = vector.shape_cast %84 : vector<64x1xf32> to vector<64x1xf32>
    %86 = vector.broadcast %85 : vector<64x1xf32> to vector<64x128xf32>
    %87 = vector.broadcast %cst_11 : f32 to vector<64x128xf32>
    %88 = arith.select %83, %86, %87 : vector<64x128xi1>, vector<64x128xf32>
    %89 = arith.addf %79, %88 : vector<64x128xf32>
    %c0_12 = arith.constant 0 : index
    %c0_13 = arith.constant 0 : index
    %90 = vector.load %arg9[%c0_12, %c0_13] : memref<64x128xf32, #tpu.memory_space<vmem>>, vector<64x128xf32>
    %c0_14 = arith.constant 0 : index
    %c0_15 = arith.constant 0 : index
    %91 = vector.load %arg5[%c0_14, %c0_15] : memref<128x128xf32, #tpu.memory_space<vmem>>, vector<128x128xf32>
    %cst_16 = arith.constant dense<0.000000e+00> : vector<64x128xf32>
    %92 = tpu.matmul %89, %91, %cst_16 {dimension_numbers = #tpu.dot_dimension_numbers<[1], [0], [0], [1], [0, 0, 1, 1], [], []>} : vector<64x128xf32>, vector<128x128xf32>, vector<64x128xf32> -> vector<64x128xf32>
    %93 = arith.addf %90, %92 : vector<64x128xf32>
    %c0_17 = arith.constant 0 : index
    %c0_18 = arith.constant 0 : index
    %94 = vector.load %arg9[%c0_17, %c0_18] : memref<64x128xf32, #tpu.memory_space<vmem>>, vector<64x128xf32>
    tpu.vector_store %arg9[%c0_17, %c0_18], %93 {strides = array<i32>} : memref<64x128xf32, #tpu.memory_space<vmem>>, vector<64x128xf32>,
    %c1_i32 = arith.constant 1 : i32
    %95 = arith.cmpi eq, %arg1, %c1_i32 : i32
    %96 = arith.extui %95 : i1 to i32
    %c0_i32_19 = arith.constant 0 : i32
    %97 = arith.cmpi ne, %96, %c0_i32_19 : i32
    scf.if %97 {
      %c0_20 = arith.constant 0 : index
      %c0_21 = arith.constant 0 : index
      %98 = vector.load %arg9[%c0_20, %c0_21] : memref<64x128xf32, #tpu.memory_space<vmem>>, vector<64x128xf32>
      %c0_22 = arith.constant 0 : index
      %c0_23 = arith.constant 0 : index
      %99 = vector.load %arg4[%c0_22, %c0_23] : memref<64x1xf32, #tpu.memory_space<vmem>>, vector<64x1xf32>
      %100 = vector.broadcast %99 : vector<64x1xf32> to vector<64x128xf32>
      %101 = arith.divf %98, %100 : vector<64x128xf32>
      %c0_24 = arith.constant 0 : index
      %c0_25 = arith.constant 0 : index
      %102 = vector.load %arg7[%c0_24, %c0_25] : memref<64x1xf32, #tpu.memory_space<vmem>>, vector<64x1xf32>
      %cst_26 = arith.constant 0.000000e+00 : f32
      %103 = vector.broadcast %cst_26 : f32 to vector<64x1xf32>
      %104 = arith.cmpf ogt, %102, %103 : vector<64x1xf32>
      %c0_27 = arith.constant 0 : index
      %c0_28 = arith.constant 0 : index
      %105 = vector.load %arg6[%c0_27, %c0_28] : memref<64x128xf32, #tpu.memory_space<vmem>>, vector<64x128xf32>
      %106 = vector.shape_cast %104 : vector<64x1xi1> to vector<64x1xi1>
      %107 = vector.broadcast %106 : vector<64x1xi1> to vector<64x128xi1>
      %108 = arith.select %107, %105, %101 : vector<64x128xi1>, vector<64x128xf32>
      %c0_29 = arith.constant 0 : index
      %c0_30 = arith.constant 0 : index
      %109 = vector.load %arg8[%c0_29, %c0_30] : memref<64x128xf32, #tpu.memory_space<vmem>>, vector<64x128xf32>
      tpu.vector_store %arg8[%c0_29, %c0_30], %108 {strides = array<i32>} : memref<64x128xf32, #tpu.memory_space<vmem>>, vector<64x128xf32>,
    } else {
    }
    return
  }
  func.func @transform_0(%arg0: i32, %arg1: i32) -> (i32, i32) {
    %c0_i32 = arith.constant 0 : i32
    %c0_i32_0 = arith.constant 0 : i32
    return %arg0, %c0_i32 : i32, i32
  }
  func.func @transform_1(%arg0: i32, %arg1: i32) -> (i32, i32) {
    %c0_i32 = arith.constant 0 : i32
    %c0_i32_0 = arith.constant 0 : i32
    return %arg0, %c0_i32 : i32, i32
  }
  func.func @transform_2(%arg0: i32, %arg1: i32) -> (i32, i32) {
    %c0_i32 = arith.constant 0 : i32
    %c0_i32_0 = arith.constant 0 : i32
    return %arg0, %c0_i32 : i32, i32
  }
  func.func @transform_3(%arg0: i32, %arg1: i32) -> (i32, i32) {
    %c0_i32 = arith.constant 0 : i32
    %c0_i32_0 = arith.constant 0 : i32
    return %arg1, %c0_i32 : i32, i32
  }
  func.func @transform_4(%arg0: i32, %arg1: i32) -> (i32, i32) {
    %c0_i32 = arith.constant 0 : i32
    %c0_i32_0 = arith.constant 0 : i32
    return %arg0, %c0_i32 : i32, i32
  }
  func.func @transform_5(%arg0: i32, %arg1: i32) -> (i32, i32) {
    %c0_i32 = arith.constant 0 : i32
    %c0_i32_0 = arith.constant 0 : i32
    return %arg0, %c0_i32 : i32, i32
  }
  func.func @transform_6(%arg0: i32, %arg1: i32) -> (i32, i32) {
    %c0_i32 = arith.constant 0 : i32
    %c0_i32_0 = arith.constant 0 : i32
    return %arg0, %c0_i32 : i32, i32
  }
}

</mosaic_0001>

<llo_original>
// kernel: tpu_custom_call.1
$region0: #{tpu_custom_call.1}
  #allocation0 [shape = 'u32[]', space=smem, size = 0x4, offset = 0x4, fixed_abs, tag = 'smem constant byte address 0x4 - core index']
  #allocation1 [shape = 'u32[144,128]{1,0:T(1,128)}', space=vmem, size = 0x12000, scoped, tag = 'internal scratch']
  #allocation2 [shape = 'f32[64,128]{1,0:T(8,128)}', space=vmem, size = 0x8000, scoped, tag = 'scratch operand']
  %s0 = inlined_call_operand.hbm [shape: f32[256,8], index: 0, kind: input, shape index: {}]
  %s1 = inlined_call_operand.hbm [shape: s32[256,8], index: 1, kind: input, shape index: {}]
  %s2 = inlined_call_operand.hbm [shape: f32[256,1], index: 2, kind: input, shape index: {}]
  %s3 = inlined_call_operand.hbm [shape: f32[256,128], index: 3, kind: input, shape index: {}]
  %s4 = inlined_call_operand.hbm [shape: f32[256,128], index: 4, kind: input, shape index: {}]
  %s5 = inlined_call_operand.hbm [shape: f32[256,1], index: 5, kind: input, shape index: {}]
  %s6 = inlined_call_operand.hbm [shape: f32[256,128], index: 6, kind: output, shape index: {}]
  %s7 = sld [smem:[#allocation0]]
  $region89: #{tpu_custom_call.1} parent=0
    _
  %s9 = ssub.s32 1, %s7
  %s10 = scalar_select 0, %s9, %s7
  $region1: #{tpu_custom_call.1} parent=0
    #allocation3 [shape = 'u8[65536]{0}', space=vmem, size = 0x10000, scoped, tag = 'input window, operand 0']
    #allocation4 [shape = 's32[2]{0}', space=sflag, size = 0x8, scoped, tag = 'scoped memory for tpu_custom_call.1']
    #allocation5 [shape = 's32[2]{0}', space=sflag, size = 0x8, scoped, tag = 'scoped memory for tpu_custom_call.1']
    #allocation6 [shape = 'u8[65536]{0}', space=vmem, size = 0x10000, scoped, tag = 'input window, operand 1']
    #allocation7 [shape = 's32[2]{0}', space=sflag, size = 0x8, scoped, tag = 'scoped memory for tpu_custom_call.1']
    #allocation8 [shape = 'u8[65536]{0}', space=vmem, size = 0x10000, scoped, tag = 'input window, operand 2']
    #allocation9 [shape = 'u8[131072]{0}', space=vmem, size = 0x20000, scoped, tag = 'input window, operand 3']
    #allocation10 [shape = 's32[2]{0}', space=sflag, size = 0x8, scoped, tag = 'scoped memory for tpu_custom_call.1']
    #allocation11 [shape = 'u8[65536]{0}', space=vmem, size = 0x10000, scoped, tag = 'input window, operand 4']
    #allocation12 [shape = 'u8[65536]{0}', space=vmem, size = 0x10000, scoped, tag = 'input window, operand 5']
    #allocation13 [shape = 's32[2]{0}', space=sflag, size = 0x8, scoped, tag = 'scoped memory for tpu_custom_call.1']
    #allocation14 [shape = 'u8[65536]{0}', space=vmem, size = 0x10000, scoped, tag = 'output window, operand 0']
    %11 = vsyncpa [#allocation4], 0
    %s12 = scalar_lea.sflag [#allocation4], 1
    %13 = vsyncpa %s12, 0
    %14 = vsyncpa [#allocation7], 0
    %s15 = scalar_lea.sflag [#allocation7], 1
    %16 = vsyncpa %s15, 0
    %17 = vsyncpa [#allocation10], 0
    %s18 = scalar_lea.sflag [#allocation10], 1
    %19 = vsyncpa %s18, 0
    %20 = vsyncpa [#allocation13], 0
    %s21 = scalar_lea.sflag [#allocation13], 1
    %22 = vsyncpa %s21, 0
    %23 = vsyncpa [#allocation5], 0
    %s24 = scalar_lea.sflag [#allocation5], 1
    %25 = vsyncpa %s24, 0
    loop: start=0, step=1, limit=10
    $region2: #{tpu_custom_call.1} parent=1 // loop_pre_header
      _
    $region3: #{tpu_custom_call.1} parent=1 // loop_header
      %s27 = sphi 0, %s31
      %p28 = scmp.ge.s32.totalorder %s27, 10
      %s34 = sphi 0, %s46
      %s35 = sphi 0, %s42
      %s36 = sphi 0, %s34
      %s37 = sphi 0, %s35
      %s38 = sphi 0, %s36
      %s39 = sphi 0, %s37
      %s49 = sphi 0, %s51
      %s52 = sphi 0, %s49
      %s53 = sphi 0, %s52
      %s69 = sphi 0, %s53
      %s75 = sphi 0, %s77
      %s78 = sphi 0, %s75
      %s79 = sphi 0, %s78
      %s95 = sphi 0, %s79
      %s101 = sphi 0, %s103
      %s104 = sphi 0, %s101
      %s105 = sphi 0, %s104
      %s121 = sphi 0, %s105
      %s127 = sphi 0, %s129
      %s130 = sphi 0, %s127
      %s131 = sphi 0, %s130
      %s147 = sphi 0, %s131
      %s153 = sphi 0, %s155
      %s156 = sphi 0, %s153
      %s157 = sphi 0, %s156
      %s173 = sphi 0, %s157
      %s179 = sphi 0, %s181
      %s182 = sphi 0, %s179
      %s183 = sphi 0, %s182
      %s199 = sphi 0, %s183
      %s205 = sphi 0, %s207
      %s208 = sphi 0, %s205
      %s209 = sphi 0, %s208
      %s225 = sphi 0, %s209
    $region4: #{tpu_custom_call.1} parent=1 // loop_header_branch
      %30 = sbr.rel (%p28) target = $region8
    $region5: #{tpu_custom_call.1} parent=1 // loop_body
      %s32 = ssub.s32 %s27, 1
      %s33 = ssub.s32 %s27, 2
      %s40 = sadd.s32 1, %s35
      %p41 = scmp.ge.s32.totalorder %s40, 2
      %s42 = scalar_select %p41, 0, %s40
      %s43 = sadd.s32 1, %s34
      %s44 = scalar_select %p41, %s43, %s34
      %p45 = scmp.ge.s32.totalorder %s44, 4
      %s46 = scalar_select %p45, 0, %s44
      %s47 = ssub.s32 %s34, %s46
      %p48 = scmp.eq.s32.totalorder %s47, 0
      %s50 = sadd.s32 %s49, 1
      %s51 = scalar_select %p48, %s49, %s50
      %p54 = pneg %p48
      %p55 = scmp.eq.s32.totalorder %s27, 7
      %p56 = por %p54, %p55
      %p57 = scmp.ne.s32.totalorder %s49, %s52
      %p58 = scmp.eq.s32.totalorder %s27, 0
      %p59 = por %p57, %p58
      %p60 = scmp.ne.s32.totalorder %s49, %s52
      %p61 = scmp.eq.s32.totalorder %s32, 7
      %p62 = por %p60, %p61
      %p63 = scmp.ne.s32.totalorder %s52, %s53
      %p64 = scmp.eq.s32.totalorder %s32, 0
      %p65 = por %p63, %p64
      %p66 = scmp.ne.s32.totalorder %s52, %s53
      %p67 = scmp.eq.s32.totalorder %s33, 7
      %p68 = por %p66, %p67
      %p70 = scmp.ne.s32.totalorder %s53, %s69
      %p71 = scmp.eq.s32.totalorder %s33, 0
      %p72 = por %p70, %p71
      %s73 = ssub.s32 %s34, %s46
      %p74 = scmp.eq.s32.totalorder %s73, 0
      %s76 = sadd.s32 %s75, 1
      %s77 = scalar_select %p74, %s75, %s76
      %p80 = pneg %p74
      %p81 = scmp.eq.s32.totalorder %s27, 7
      %p82 = por %p80, %p81
      %p83 = scmp.ne.s32.totalorder %s75, %s78
      %p84 = scmp.eq.s32.totalorder %s27, 0
      %p85 = por %p83, %p84
      %p86 = scmp.ne.s32.totalorder %s75, %s78
      %p87 = scmp.eq.s32.totalorder %s32, 7
      %p88 = por %p86, %p87
      %p89 = scmp.ne.s32.totalorder %s78, %s79
      %p90 = scmp.eq.s32.totalorder %s32, 0
      %p91 = por %p89, %p90
      %p92 = scmp.ne.s32.totalorder %s78, %s79
      %p93 = scmp.eq.s32.totalorder %s33, 7
      %p94 = por %p92, %p93
      %p96 = scmp.ne.s32.totalorder %s79, %s95
      %p97 = scmp.eq.s32.totalorder %s33, 0
      %p98 = por %p96, %p97
      %s99 = ssub.s32 %s34, %s46
      %p100 = scmp.eq.s32.totalorder %s99, 0
      %s102 = sadd.s32 %s101, 1
      %s103 = scalar_select %p100, %s101, %s102
      %p106 = pneg %p100
      %p107 = scmp.eq.s32.totalorder %s27, 7
      %p108 = por %p106, %p107
      %p109 = scmp.ne.s32.totalorder %s101, %s104
      %p110 = scmp.eq.s32.totalorder %s27, 0
      %p111 = por %p109, %p110
      %p112 = scmp.ne.s32.totalorder %s101, %s104
      %p113 = scmp.eq.s32.totalorder %s32, 7
      %p114 = por %p112, %p113
      %p115 = scmp.ne.s32.totalorder %s104, %s105
      %p116 = scmp.eq.s32.totalorder %s32, 0
      %p117 = por %p115, %p116
      %p118 = scmp.ne.s32.totalorder %s104, %s105
      %p119 = scmp.eq.s32.totalorder %s33, 7
      %p120 = por %p118, %p119
      %p122 = scmp.ne.s32.totalorder %s105, %s121
      %p123 = scmp.eq.s32.totalorder %s33, 0
      %p124 = por %p122, %p123
      %s125 = ssub.s32 %s35, %s42
      %p126 = scmp.eq.s32.totalorder %s125, 0
      %s128 = sadd.s32 %s127, 1
      %s129 = scalar_select %p126, %s127, %s128
      %p132 = pneg %p126
      %p133 = scmp.eq.s32.totalorder %s27, 7
      %p134 = por %p132, %p133
      %p135 = scmp.ne.s32.totalorder %s127, %s130
      %p136 = scmp.eq.s32.totalorder %s27, 0
      %p137 = por %p135, %p136
      %p138 = scmp.ne.s32.totalorder %s127, %s130
      %p139 = scmp.eq.s32.totalorder %s32, 7
      %p140 = por %p138, %p139
      %p141 = scmp.ne.s32.totalorder %s130, %s131
      %p142 = scmp.eq.s32.totalorder %s32, 0
      %p143 = por %p141, %p142
      %p144 = scmp.ne.s32.totalorder %s130, %s131
      %p145 = scmp.eq.s32.totalorder %s33, 7
      %p146 = por %p144, %p145
      %p148 = scmp.ne.s32.totalorder %s131, %s147
      %p149 = scmp.eq.s32.totalorder %s33, 0
      %p150 = por %p148, %p149
      %s151 = ssub.s32 %s34, %s46
      %p152 = scmp.eq.s32.totalorder %s151, 0
      %s154 = sadd.s32 %s153, 1
      %s155 = scalar_select %p152, %s153, %s154
      %p158 = pneg %p152
      %p159 = scmp.eq.s32.totalorder %s27, 7
      %p160 = por %p158, %p159
      %p161 = scmp.ne.s32.totalorder %s153, %s156
      %p162 = scmp.eq.s32.totalorder %s27, 0
      %p163 = por %p161, %p162
      %p164 = scmp.ne.s32.totalorder %s153, %s156
      %p165 = scmp.eq.s32.totalorder %s32, 7
      %p166 = por %p164, %p165
      %p167 = scmp.ne.s32.totalorder %s156, %s157
      %p168 = scmp.eq.s32.totalorder %s32, 0
      %p169 = por %p167, %p168
      %p170 = scmp.ne.s32.totalorder %s156, %s157
      %p171 = scmp.eq.s32.totalorder %s33, 7
      %p172 = por %p170, %p171
      %p174 = scmp.ne.s32.totalorder %s157, %s173
      %p175 = scmp.eq.s32.totalorder %s33, 0
      %p176 = por %p174, %p175
      %s177 = ssub.s32 %s34, %s46
      %p178 = scmp.eq.s32.totalorder %s177, 0
      %s180 = sadd.s32 %s179, 1
      %s181 = scalar_select %p178, %s179, %s180
      %p184 = pneg %p178
      %p185 = scmp.eq.s32.totalorder %s27, 7
      %p186 = por %p184, %p185
      %p187 = scmp.ne.s32.totalorder %s179, %s182
      %p188 = scmp.eq.s32.totalorder %s27, 0
      %p189 = por %p187, %p188
      %p190 = scmp.ne.s32.totalorder %s179, %s182
      %p191 = scmp.eq.s32.totalorder %s32, 7
      %p192 = por %p190, %p191
      %p193 = scmp.ne.s32.totalorder %s182, %s183
      %p194 = scmp.eq.s32.totalorder %s32, 0
      %p195 = por %p193, %p194
      %p196 = scmp.ne.s32.totalorder %s182, %s183
      %p197 = scmp.eq.s32.totalorder %s33, 7
      %p198 = por %p196, %p197
      %p200 = scmp.ne.s32.totalorder %s183, %s199
      %p201 = scmp.eq.s32.totalorder %s33, 0
      %p202 = por %p200, %p201
      %s203 = ssub.s32 %s34, %s46
      %p204 = scmp.eq.s32.totalorder %s203, 0
      %s206 = sadd.s32 %s205, 1
      %s207 = scalar_select %p204, %s205, %s206
      %p210 = pneg %p204
      %p211 = scmp.eq.s32.totalorder %s27, 7
      %p212 = por %p210, %p211
      %p213 = scmp.ne.s32.totalorder %s205, %s208
      %p214 = scmp.eq.s32.totalorder %s27, 0
      %p215 = por %p213, %p214
      %p216 = scmp.ne.s32.totalorder %s205, %s208
      %p217 = scmp.eq.s32.totalorder %s32, 7
      %p218 = por %p216, %p217
      %p219 = scmp.ne.s32.totalorder %s208, %s209
      %p220 = scmp.eq.s32.totalorder %s32, 0
      %p221 = por %p219, %p220
      %p222 = scmp.ne.s32.totalorder %s208, %s209
      %p223 = scmp.eq.s32.totalorder %s33, 7
      %p224 = por %p222, %p223
      %p226 = scmp.ne.s32.totalorder %s209, %s225
      %p227 = scmp.eq.s32.totalorder %s33, 0
      %p228 = por %p226, %p227
      %p229 = scmp.le.s32.totalorder 1, %s27
      %p230 = scmp.lt.s32.totalorder %s27, 9
      %p231 = pnand %p229, %p230
      %p232 = pneg %p231
      // Predicated region
      $region9: #{tpu_custom_call.1} parent=5 // pred_check
        _
      $region10: #{tpu_custom_call.1} parent=5 // pred_check_branch
        %234 = sbr.rel (%p231) target = $region12
      $region11: #{tpu_custom_call.1} parent=5 // pred_region
        %s235 = ssub.s32 %s27, 1
      $region12: #{tpu_custom_call.1} parent=5 // pred_fallthru
        _
      %p236 = scmp.lt.s32.totalorder %s27, 8
      // Predicated region
      $region13: #{tpu_custom_call.1} parent=5 // pred_check
        %p237 = pneg %p236
      $region14: #{tpu_custom_call.1} parent=5 // pred_check_branch
        %239 = sbr.rel (%p237) target = $region16
      $region15: #{tpu_custom_call.1} parent=5 // pred_region
        // Predicated region
        $region17: #{tpu_custom_call.1} parent=15 // pred_check
          %p240 = pneg %p59
        $region18: #{tpu_custom_call.1} parent=15 // pred_check_branch
          %242 = sbr.rel (%p240) target = $region20
        $region19: #{tpu_custom_call.1} parent=15 // pred_region
          %s243 = sand.u32 %s49, 1
          %s244 = scalar_lea.sflag [#allocation4], %s243
          %s245 = sand.u32 %s49, 1
          %s246 = smul.addr %s245, 64
          %s247 = scalar_lea.vmem [#allocation3], %s246
          %s248 = smul.u32 8, %s34
          %s250 = ssub.s32 1024, 1024
          %251 = vsyncadd %s244, %s250
          %s252 = smul.addr %s248, 128
          %s253 = scalar_lea.hbm %s0, %s252
          %s254 = sshll.u32 %s247, 4
          %s255 = int_to_ptr.vmem [resolvable:$true] %s254
          %260 = dma.hbm_to_vmem [thread:$0]  %s253, 1024, %s255, %s244, 128, 128, 8
        $region20: #{tpu_custom_call.1} parent=15 // pred_fallthru
          _
        // Predicated region
        $region21: #{tpu_custom_call.1} parent=15 // pred_check
          %p261 = pneg %p85
        $region22: #{tpu_custom_call.1} parent=15 // pred_check_branch
          %263 = sbr.rel (%p261) target = $region24
        $region23: #{tpu_custom_call.1} parent=15 // pred_region
          %s264 = sand.u32 %s27, 1
          %s265 = scalar_lea.sflag [#allocation7], %s264
          %s266 = sand.u32 %s75, 1
          %s267 = smul.addr %s266, 64
          %s268 = scalar_lea.vmem [#allocation6], %s267
          %s269 = smul.u32 8, %s34
          %s271 = ssub.s32 1024, 1024
          %272 = vsyncadd %s265, %s271
          %s273 = smul.addr %s269, 128
          %s274 = scalar_lea.hbm %s1, %s273
          %s275 = sshll.u32 %s268, 4
          %s276 = int_to_ptr.vmem [resolvable:$true] %s275
          %281 = dma.hbm_to_vmem [thread:$0]  %s274, 1024, %s276, %s265, 128, 128, 8
        $region24: #{tpu_custom_call.1} parent=15 // pred_fallthru
          _
        // Predicated region
        $region25: #{tpu_custom_call.1} parent=15 // pred_check
          %p282 = pneg %p111
        $region26: #{tpu_custom_call.1} parent=15 // pred_check_branch
          %284 = sbr.rel (%p282) target = $region28
        $region27: #{tpu_custom_call.1} parent=15 // pred_region
          %s285 = sand.u32 %s27, 1
          %s286 = scalar_lea.sflag [#allocation7], %s285
          %s287 = sand.u32 %s101, 1
          %s288 = smul.addr %s287, 64
          %s289 = scalar_lea.vmem [#allocation8], %s288
          %s290 = smul.u32 8, %s34
          %s292 = ssub.s32 1024, 1024
          %293 = vsyncadd %s286, %s292
          %s294 = smul.addr %s290, 128
          %s295 = scalar_lea.hbm %s2, %s294
          %s296 = sshll.u32 %s289, 4
          %s297 = int_to_ptr.vmem [resolvable:$true] %s296
          %302 = dma.hbm_to_vmem [thread:$0]  %s295, 1024, %s297, %s286, 128, 128, 8
        $region28: #{tpu_custom_call.1} parent=15 // pred_fallthru
          _
        // Predicated region
        $region29: #{tpu_custom_call.1} parent=15 // pred_check
          %p303 = pneg %p137
        $region30: #{tpu_custom_call.1} parent=15 // pred_check_branch
          %305 = sbr.rel (%p303) target = $region32
        $region31: #{tpu_custom_call.1} parent=15 // pred_region
          %s306 = sand.u32 %s27, 1
          %s307 = scalar_lea.sflag [#allocation10], %s306
          %s308 = sand.u32 %s127, 1
          %s309 = smul.addr %s308, 128
          %s310 = scalar_lea.vmem [#allocation9], %s309
          %s311 = smul.u32 16, %s35
          %s313 = ssub.s32 2048, 2048
          %314 = vsyncadd %s307, %s313
          %s315 = smul.addr %s311, 128
          %s316 = scalar_lea.hbm %s3, %s315
          %s317 = sshll.u32 %s310, 4
          %s318 = int_to_ptr.vmem [resolvable:$true] %s317
          %323 = dma.hbm_to_vmem [thread:$0]  %s316, 2048, %s318, %s307, 128, 128, 8
        $region32: #{tpu_custom_call.1} parent=15 // pred_fallthru
          _
        // Predicated region
        $region33: #{tpu_custom_call.1} parent=15 // pred_check
          %p324 = pneg %p163
        $region34: #{tpu_custom_call.1} parent=15 // pred_check_branch
          %326 = sbr.rel (%p324) target = $region36
        $region35: #{tpu_custom_call.1} parent=15 // pred_region
          %s327 = sand.u32 %s27, 1
          %s328 = scalar_lea.sflag [#allocation10], %s327
          %s329 = sand.u32 %s153, 1
          %s330 = smul.addr %s329, 64
          %s331 = scalar_lea.vmem [#allocation11], %s330
          %s332 = smul.u32 8, %s34
          %s334 = ssub.s32 1024, 1024
          %335 = vsyncadd %s328, %s334
          %s336 = smul.addr %s332, 128
          %s337 = scalar_lea.hbm %s4, %s336
          %s338 = sshll.u32 %s331, 4
          %s339 = int_to_ptr.vmem [resolvable:$true] %s338
          %344 = dma.hbm_to_vmem [thread:$0]  %s337, 1024, %s339, %s328, 128, 128, 8
        $region36: #{tpu_custom_call.1} parent=15 // pred_fallthru
          _
        // Predicated region
        $region37: #{tpu_custom_call.1} parent=15 // pred_check
          %p345 = pneg %p189
        $region38: #{tpu_custom_call.1} parent=15 // pred_check_branch
          %347 = sbr.rel (%p345) target = $region40
        $region39: #{tpu_custom_call.1} parent=15 // pred_region
          %s348 = sand.u32 %s179, 1
          %s349 = scalar_lea.sflag [#allocation13], %s348
          %s350 = sand.u32 %s179, 1
          %s351 = smul.addr %s350, 64
          %s352 = scalar_lea.vmem [#allocation12], %s351
          %s353 = smul.u32 8, %s34
          %s355 = ssub.s32 1024, 1024
          %356 = vsyncadd %s349, %s355
          %s357 = smul.addr %s353, 128
          %s358 = scalar_lea.hbm %s5, %s357
          %s359 = sshll.u32 %s352, 4
          %s360 = int_to_ptr.vmem [resolvable:$true] %s359
          %365 = dma.hbm_to_vmem [thread:$0]  %s358, 1024, %s360, %s349, 128, 128, 8
        $region40: #{tpu_custom_call.1} parent=15 // pred_fallthru
          _
      $region16: #{tpu_custom_call.1} parent=5 // pred_fallthru
        _
      %p366 = scmp.le.s32.totalorder 1, %s27
      %p367 = scmp.lt.s32.totalorder %s27, 9
      %p368 = pnand %p366, %p367
      %p369 = pneg %p368
      // Predicated region
      $region41: #{tpu_custom_call.1} parent=5 // pred_check
        _
      $region42: #{tpu_custom_call.1} parent=5 // pred_check_branch
        %371 = sbr.rel (%p368) target = $region44
      $region43: #{tpu_custom_call.1} parent=5 // pred_region
        %s372 = ssub.s32 %s27, 1
        %s373 = sand.u32 %s52, 1
        %s374 = scalar_lea.sflag [#allocation4], %s373
        %s375 = sand.u32 %s52, 1
        %s376 = smul.addr %s375, 64
        %s377 = scalar_lea.vmem [#allocation3], %s376
        // Predicated region
        $region45: #{tpu_custom_call.1} parent=43 // pred_check
          %p378 = pneg %p65
        $region46: #{tpu_custom_call.1} parent=43 // pred_check_branch
          %380 = sbr.rel (%p378) target = $region48
        $region47: #{tpu_custom_call.1} parent=43 // pred_region
          %381 = dma.done %s374, 1024
        $region48: #{tpu_custom_call.1} parent=43 // pred_fallthru
          _
        %s382 = sand.u32 %s32, 1
        %s383 = scalar_lea.sflag [#allocation7], %s382
        %s384 = sand.u32 %s78, 1
        %s385 = smul.addr %s384, 64
        %s386 = scalar_lea.vmem [#allocation6], %s385
        // Predicated region
        $region49: #{tpu_custom_call.1} parent=43 // pred_check
          %p387 = pneg %p91
        $region50: #{tpu_custom_call.1} parent=43 // pred_check_branch
          %389 = sbr.rel (%p387) target = $region52
        $region51: #{tpu_custom_call.1} parent=43 // pred_region
          %390 = dma.done %s383, 1024
        $region52: #{tpu_custom_call.1} parent=43 // pred_fallthru
          _
        %s391 = sand.u32 %s32, 1
        %s392 = scalar_lea.sflag [#allocation7], %s391
        %s393 = sand.u32 %s104, 1
        %s394 = smul.addr %s393, 64
        %s395 = scalar_lea.vmem [#allocation8], %s394
        // Predicated region
        $region53: #{tpu_custom_call.1} parent=43 // pred_check
          %p396 = pneg %p117
        $region54: #{tpu_custom_call.1} parent=43 // pred_check_branch
          %398 = sbr.rel (%p396) target = $region56
        $region55: #{tpu_custom_call.1} parent=43 // pred_region
          %399 = dma.done %s392, 1024
        $region56: #{tpu_custom_call.1} parent=43 // pred_fallthru
          _
        %s400 = sand.u32 %s32, 1
        %s401 = scalar_lea.sflag [#allocation10], %s400
        %s402 = sand.u32 %s130, 1
        %s403 = smul.addr %s402, 128
        %s404 = scalar_lea.vmem [#allocation9], %s403
        // Predicated region
        $region57: #{tpu_custom_call.1} parent=43 // pred_check
          %p405 = pneg %p143
        $region58: #{tpu_custom_call.1} parent=43 // pred_check_branch
          %407 = sbr.rel (%p405) target = $region60
        $region59: #{tpu_custom_call.1} parent=43 // pred_region
          %408 = dma.done %s401, 2048
        $region60: #{tpu_custom_call.1} parent=43 // pred_fallthru
          _
        %s409 = sand.u32 %s32, 1
        %s410 = scalar_lea.sflag [#allocation10], %s409
        %s411 = sand.u32 %s156, 1
        %s412 = smul.addr %s411, 64
        %s413 = scalar_lea.vmem [#allocation11], %s412
        // Predicated region
        $region61: #{tpu_custom_call.1} parent=43 // pred_check
          %p414 = pneg %p169
        $region62: #{tpu_custom_call.1} parent=43 // pred_check_branch
          %416 = sbr.rel (%p414) target = $region64
        $region63: #{tpu_custom_call.1} parent=43 // pred_region
          %417 = dma.done %s410, 1024
        $region64: #{tpu_custom_call.1} parent=43 // pred_fallthru
          _
        %s418 = sand.u32 %s182, 1
        %s419 = scalar_lea.sflag [#allocation13], %s418
        %s420 = sand.u32 %s182, 1
        %s421 = smul.addr %s420, 64
        %s422 = scalar_lea.vmem [#allocation12], %s421
        // Predicated region
        $region65: #{tpu_custom_call.1} parent=43 // pred_check
          %p423 = pneg %p195
        $region66: #{tpu_custom_call.1} parent=43 // pred_check_branch
          %425 = sbr.rel (%p423) target = $region68
        $region67: #{tpu_custom_call.1} parent=43 // pred_region
          %426 = dma.done %s419, 1024
        $region68: #{tpu_custom_call.1} parent=43 // pred_fallthru
          _
        %s427 = sand.u32 %s52, 1
        %s428 = scalar_lea.sflag [#allocation4], %s427
        %s429 = sand.u32 %s52, 1
        %s430 = smul.addr %s429, 64
        %s431 = scalar_lea.vmem [#allocation3], %s430
        %p432 = pneg %p65
        %p433 = pneg %p62
        %s434 = sand.u32 %s32, 1
        %s435 = scalar_lea.sflag [#allocation7], %s434
        %s436 = sand.u32 %s78, 1
        %s437 = smul.addr %s436, 64
        %s438 = scalar_lea.vmem [#allocation6], %s437
        %p439 = pneg %p91
        %p440 = pneg %p88
        %s441 = sand.u32 %s32, 1
        %s442 = scalar_lea.sflag [#allocation7], %s441
        %s443 = sand.u32 %s104, 1
        %s444 = smul.addr %s443, 64
        %s445 = scalar_lea.vmem [#allocation8], %s444
        %p446 = pneg %p117
        %p447 = pneg %p114
        %s448 = sand.u32 %s32, 1
        %s449 = scalar_lea.sflag [#allocation10], %s448
        %s450 = sand.u32 %s130, 1
        %s451 = smul.addr %s450, 128
        %s452 = scalar_lea.vmem [#allocation9], %s451
        %p453 = pneg %p143
        %p454 = pneg %p140
        %s455 = sand.u32 %s32, 1
        %s456 = scalar_lea.sflag [#allocation10], %s455
        %s457 = sand.u32 %s156, 1
        %s458 = smul.addr %s457, 64
        %s459 = scalar_lea.vmem [#allocation11], %s458
        %p460 = pneg %p169
        %p461 = pneg %p166
        %s462 = sand.u32 %s182, 1
        %s463 = scalar_lea.sflag [#allocation13], %s462
        %s464 = sand.u32 %s182, 1
        %s465 = smul.addr %s464, 64
        %s466 = scalar_lea.vmem [#allocation12], %s465
        %p467 = pneg %p195
        %p468 = pneg %p192
        %p469 = pneg %p221
        %p470 = pneg %p218
        %s471 = sand.u32 %s208, 1
        %s472 = scalar_lea.sflag [#allocation5], %s471
        %s473 = sand.u32 %s208, 1
        %s474 = smul.addr %s473, 64
        %s475 = scalar_lea.vmem [#allocation14], %s474
        %s476 = smul.u32 8, %s36
        %s477 = smul.u32 8, %s36
        %s478 = smul.u32 8, %s36
        %s479 = smul.u32 16, %s37
        %s480 = smul.u32 8, %s36
        %s481 = smul.u32 8, %s36
        %s482 = smul.u32 8, %s36
        %p483 = scmp.eq.s32.totalorder %s37, 0
        // Predicated region
        $region69: #{tpu_custom_call.1} parent=43 // pred_check
          %p484 = pneg %p483
        $region70: #{tpu_custom_call.1} parent=43 // pred_check_branch
          %486 = sbr.rel (%p484) target = $region72
        $region71: #{tpu_custom_call.1} parent=43 // pred_region
          %487 = vst [vmem:[#allocation2] sm:$0xff] 0.0
          %488 = vst [vmem:[#allocation2 + $0x8] sm:$0xff] 0.0
          %489 = vst [vmem:[#allocation2 + $0x10] sm:$0xff] 0.0
          %490 = vst [vmem:[#allocation2 + $0x18] sm:$0xff] 0.0
          %491 = vst [vmem:[#allocation2 + $0x20] sm:$0xff] 0.0
          %492 = vst [vmem:[#allocation2 + $0x28] sm:$0xff] 0.0
          %493 = vst [vmem:[#allocation2 + $0x30] sm:$0xff] 0.0
          %494 = vst [vmem:[#allocation2 + $0x38] sm:$0xff] 0.0
        $region72: #{tpu_custom_call.1} parent=43 // pred_fallthru
          _
        %v495 = vld [vmem:[%s377] sm:$0xff]
        %v496 = vld [vmem:[%s377 + $0x8] sm:$0xff]
        %v497 = vld [vmem:[%s377 + $0x10] sm:$0xff]
        %v498 = vld [vmem:[%s377 + $0x18] sm:$0xff]
        %v499 = vld [vmem:[%s377 + $0x20] sm:$0xff]
        %v500 = vld [vmem:[%s377 + $0x28] sm:$0xff]
        %v501 = vld [vmem:[%s377 + $0x30] sm:$0xff]
        %v502 = vld [vmem:[%s377 + $0x38] sm:$0xff]
        %v503 = vld [vmem:[%s386] sm:$0xff]
        %v504 = vld [vmem:[%s386 + $0x8] sm:$0xff]
        %v505 = vld [vmem:[%s386 + $0x10] sm:$0xff]
        %v506 = vld [vmem:[%s386 + $0x18] sm:$0xff]
        %v507 = vld [vmem:[%s386 + $0x20] sm:$0xff]
        %v508 = vld [vmem:[%s386 + $0x28] sm:$0xff]
        %v509 = vld [vmem:[%s386 + $0x30] sm:$0xff]
        %v510 = vld [vmem:[%s386 + $0x38] sm:$0xff]
        %s511 = smul.u32 %s37, 128
        %v512 = vlaneseq
        %v513 = vand.u32 %v512, 127
        %v514 = vstv %s511
        %v515 = vadd.s32 %v514, %v513
        %516 = vset.pattern.permute.xlu0 0
        %517 = vperm.xlu0 %516, %v503
        %v518 = vpop.permute.xlu0 %517
        %519 = vset.pattern.permute.xlu0 0
        %520 = vperm.xlu0 %519, %v504
        %v521 = vpop.permute.xlu0 %520
        %522 = vset.pattern.permute.xlu0 0
        %523 = vperm.xlu0 %522, %v505
        %v524 = vpop.permute.xlu0 %523
        %525 = vset.pattern.permute.xlu0 0
        %526 = vperm.xlu0 %525, %v506
        %v527 = vpop.permute.xlu0 %526
        %528 = vset.pattern.permute.xlu0 0
        %529 = vperm.xlu0 %528, %v507
        %v530 = vpop.permute.xlu0 %529
        %531 = vset.pattern.permute.xlu0 0
        %532 = vperm.xlu0 %531, %v508
        %v533 = vpop.permute.xlu0 %532
        %534 = vset.pattern.permute.xlu0 0
        %535 = vperm.xlu0 %534, %v509
        %v536 = vpop.permute.xlu0 %535
        %537 = vset.pattern.permute.xlu0 0
        %538 = vperm.xlu0 %537, %v510
        %v539 = vpop.permute.xlu0 %538
        %vm540 = vcmp.eq.s32.totalorder %v518, %v515
        %vm541 = vcmp.eq.s32.totalorder %v521, %v515
        %vm542 = vcmp.eq.s32.totalorder %v524, %v515
        %vm543 = vcmp.eq.s32.totalorder %v527, %v515
        %vm544 = vcmp.eq.s32.totalorder %v530, %v515
        %vm545 = vcmp.eq.s32.totalorder %v533, %v515
        %vm546 = vcmp.eq.s32.totalorder %v536, %v515
        %vm547 = vcmp.eq.s32.totalorder %v539, %v515
        %549 = vset.pattern.permute.xlu0 0
        %550 = vperm.xlu0 %549, %v495
        %v551 = vpop.permute.xlu0 %550
        %554 = vset.pattern.permute.xlu0 0
        %555 = vperm.xlu0 %554, %v496
        %v556 = vpop.permute.xlu0 %555
        %559 = vset.pattern.permute.xlu0 0
        %560 = vperm.xlu0 %559, %v497
        %v561 = vpop.permute.xlu0 %560
        %564 = vset.pattern.permute.xlu0 0
        %565 = vperm.xlu0 %564, %v498
        %v566 = vpop.permute.xlu0 %565
        %569 = vset.pattern.permute.xlu0 0
        %570 = vperm.xlu0 %569, %v499
        %v571 = vpop.permute.xlu0 %570
        %574 = vset.pattern.permute.xlu0 0
        %575 = vperm.xlu0 %574, %v500
        %v576 = vpop.permute.xlu0 %575
        %579 = vset.pattern.permute.xlu0 0
        %580 = vperm.xlu0 %579, %v501
        %v581 = vpop.permute.xlu0 %580
        %584 = vset.pattern.permute.xlu0 0
        %585 = vperm.xlu0 %584, %v502
        %v586 = vpop.permute.xlu0 %585
        %v588 = vsel %vm540, %v551, 0.0
        %v589 = vsel %vm541, %v556, 0.0
        %v590 = vsel %vm542, %v561, 0.0
        %v591 = vsel %vm543, %v566, 0.0
        %v592 = vsel %vm544, %v571, 0.0
        %v593 = vsel %vm545, %v576, 0.0
        %v594 = vsel %vm546, %v581, 0.0
        %v595 = vsel %vm547, %v586, 0.0
        %v596 = vadd.f32 %v588, 0.0
        %v597 = vadd.f32 %v589, 0.0
        %v598 = vadd.f32 %v590, 0.0
        %v599 = vadd.f32 %v591, 0.0
        %v600 = vadd.f32 %v592, 0.0
        %v601 = vadd.f32 %v593, 0.0
        %v602 = vadd.f32 %v594, 0.0
        %v603 = vadd.f32 %v595, 0.0
        %604 = vset.pattern.permute.xlu0 1
        %605 = vperm.xlu0 %604, %v503
        %v606 = vpop.permute.xlu0 %605
        %607 = vset.pattern.permute.xlu0 1
        %608 = vperm.xlu0 %607, %v504
        %v609 = vpop.permute.xlu0 %608
        %610 = vset.pattern.permute.xlu0 1
        %611 = vperm.xlu0 %610, %v505
        %v612 = vpop.permute.xlu0 %611
        %613 = vset.pattern.permute.xlu0 1
        %614 = vperm.xlu0 %613, %v506
        %v615 = vpop.permute.xlu0 %614
        %616 = vset.pattern.permute.xlu0 1
        %617 = vperm.xlu0 %616, %v507
        %v618 = vpop.permute.xlu0 %617
        %619 = vset.pattern.permute.xlu0 1
        %620 = vperm.xlu0 %619, %v508
        %v621 = vpop.permute.xlu0 %620
        %622 = vset.pattern.permute.xlu0 1
        %623 = vperm.xlu0 %622, %v509
        %v624 = vpop.permute.xlu0 %623
        %625 = vset.pattern.permute.xlu0 1
        %626 = vperm.xlu0 %625, %v510
        %v627 = vpop.permute.xlu0 %626
        %vm628 = vcmp.eq.s32.totalorder %v606, %v515
        %vm629 = vcmp.eq.s32.totalorder %v609, %v515
        %vm630 = vcmp.eq.s32.totalorder %v612, %v515
        %vm631 = vcmp.eq.s32.totalorder %v615, %v515
        %vm632 = vcmp.eq.s32.totalorder %v618, %v515
        %vm633 = vcmp.eq.s32.totalorder %v621, %v515
        %vm634 = vcmp.eq.s32.totalorder %v624, %v515
        %vm635 = vcmp.eq.s32.totalorder %v627, %v515
        %636 = vset.pattern.permute.xlu0 1
        %637 = vperm.xlu0 %636, %v495
        %v638 = vpop.permute.xlu0 %637
        %640 = vset.pattern.permute.xlu0 1
        %641 = vperm.xlu0 %640, %v496
        %v642 = vpop.permute.xlu0 %641
        %644 = vset.pattern.permute.xlu0 1
        %645 = vperm.xlu0 %644, %v497
        %v646 = vpop.permute.xlu0 %645
        %648 = vset.pattern.permute.xlu0 1
        %649 = vperm.xlu0 %648, %v498
        %v650 = vpop.permute.xlu0 %649
        %652 = vset.pattern.permute.xlu0 1
        %653 = vperm.xlu0 %652, %v499
        %v654 = vpop.permute.xlu0 %653
        %656 = vset.pattern.permute.xlu0 1
        %657 = vperm.xlu0 %656, %v500
        %v658 = vpop.permute.xlu0 %657
        %660 = vset.pattern.permute.xlu0 1
        %661 = vperm.xlu0 %660, %v501
        %v662 = vpop.permute.xlu0 %661
        %664 = vset.pattern.permute.xlu0 1
        %665 = vperm.xlu0 %664, %v502
        %v666 = vpop.permute.xlu0 %665
        %v668 = vsel %vm628, %v638, 0.0
        %v669 = vsel %vm629, %v642, 0.0
        %v670 = vsel %vm630, %v646, 0.0
        %v671 = vsel %vm631, %v650, 0.0
        %v672 = vsel %vm632, %v654, 0.0
        %v673 = vsel %vm633, %v658, 0.0
        %v674 = vsel %vm634, %v662, 0.0
        %v675 = vsel %vm635, %v666, 0.0
        %v676 = vadd.f32 %v596, %v668
        %v677 = vadd.f32 %v597, %v669
        %v678 = vadd.f32 %v598, %v670
        %v679 = vadd.f32 %v599, %v671
        %v680 = vadd.f32 %v600, %v672
        %v681 = vadd.f32 %v601, %v673
        %v682 = vadd.f32 %v602, %v674
        %v683 = vadd.f32 %v603, %v675
        %684 = vset.pattern.permute.xlu0 2
        %685 = vperm.xlu0 %684, %v503
        %v686 = vpop.permute.xlu0 %685
        %687 = vset.pattern.permute.xlu0 2
        %688 = vperm.xlu0 %687, %v504
        %v689 = vpop.permute.xlu0 %688
        %690 = vset.pattern.permute.xlu0 2
        %691 = vperm.xlu0 %690, %v505
        %v692 = vpop.permute.xlu0 %691
        %693 = vset.pattern.permute.xlu0 2
        %694 = vperm.xlu0 %693, %v506
        %v695 = vpop.permute.xlu0 %694
        %696 = vset.pattern.permute.xlu0 2
        %697 = vperm.xlu0 %696, %v507
        %v698 = vpop.permute.xlu0 %697
        %699 = vset.pattern.permute.xlu0 2
        %700 = vperm.xlu0 %699, %v508
        %v701 = vpop.permute.xlu0 %700
        %702 = vset.pattern.permute.xlu0 2
        %703 = vperm.xlu0 %702, %v509
        %v704 = vpop.permute.xlu0 %703
        %705 = vset.pattern.permute.xlu0 2
        %706 = vperm.xlu0 %705, %v510
        %v707 = vpop.permute.xlu0 %706
        %vm708 = vcmp.eq.s32.totalorder %v686, %v515
        %vm709 = vcmp.eq.s32.totalorder %v689, %v515
        %vm710 = vcmp.eq.s32.totalorder %v692, %v515
        %vm711 = vcmp.eq.s32.totalorder %v695, %v515
        %vm712 = vcmp.eq.s32.totalorder %v698, %v515
        %vm713 = vcmp.eq.s32.totalorder %v701, %v515
        %vm714 = vcmp.eq.s32.totalorder %v704, %v515
        %vm715 = vcmp.eq.s32.totalorder %v707, %v515
        %716 = vset.pattern.permute.xlu0 2
        %717 = vperm.xlu0 %716, %v495
        %v718 = vpop.permute.xlu0 %717
        %720 = vset.pattern.permute.xlu0 2
        %721 = vperm.xlu0 %720, %v496
        %v722 = vpop.permute.xlu0 %721
        %724 = vset.pattern.permute.xlu0 2
        %725 = vperm.xlu0 %724, %v497
        %v726 = vpop.permute.xlu0 %725
        %728 = vset.pattern.permute.xlu0 2
        %729 = vperm.xlu0 %728, %v498
        %v730 = vpop.permute.xlu0 %729
        %732 = vset.pattern.permute.xlu0 2
        %733 = vperm.xlu0 %732, %v499
        %v734 = vpop.permute.xlu0 %733
        %736 = vset.pattern.permute.xlu0 2
        %737 = vperm.xlu0 %736, %v500
        %v738 = vpop.permute.xlu0 %737
        %740 = vset.pattern.permute.xlu0 2
        %741 = vperm.xlu0 %740, %v501
        %v742 = vpop.permute.xlu0 %741
        %744 = vset.pattern.permute.xlu0 2
        %745 = vperm.xlu0 %744, %v502
        %v746 = vpop.permute.xlu0 %745
        %v748 = vsel %vm708, %v718, 0.0
        %v749 = vsel %vm709, %v722, 0.0
        %v750 = vsel %vm710, %v726, 0.0
        %v751 = vsel %vm711, %v730, 0.0
        %v752 = vsel %vm712, %v734, 0.0
        %v753 = vsel %vm713, %v738, 0.0
        %v754 = vsel %vm714, %v742, 0.0
        %v755 = vsel %vm715, %v746, 0.0
        %v756 = vadd.f32 %v676, %v748
        %v757 = vadd.f32 %v677, %v749
        %v758 = vadd.f32 %v678, %v750
        %v759 = vadd.f32 %v679, %v751
        %v760 = vadd.f32 %v680, %v752
        %v761 = vadd.f32 %v681, %v753
        %v762 = vadd.f32 %v682, %v754
        %v763 = vadd.f32 %v683, %v755
        %764 = vset.pattern.permute.xlu0 3
        %765 = vperm.xlu0 %764, %v503
        %v766 = vpop.permute.xlu0 %765
        %767 = vset.pattern.permute.xlu0 3
        %768 = vperm.xlu0 %767, %v504
        %v769 = vpop.permute.xlu0 %768
        %770 = vset.pattern.permute.xlu0 3
        %771 = vperm.xlu0 %770, %v505
        %v772 = vpop.permute.xlu0 %771
        %773 = vset.pattern.permute.xlu0 3
        %774 = vperm.xlu0 %773, %v506
        %v775 = vpop.permute.xlu0 %774
        %776 = vset.pattern.permute.xlu0 3
        %777 = vperm.xlu0 %776, %v507
        %v778 = vpop.permute.xlu0 %777
        %779 = vset.pattern.permute.xlu0 3
        %780 = vperm.xlu0 %779, %v508
        %v781 = vpop.permute.xlu0 %780
        %782 = vset.pattern.permute.xlu0 3
        %783 = vperm.xlu0 %782, %v509
        %v784 = vpop.permute.xlu0 %783
        %785 = vset.pattern.permute.xlu0 3
        %786 = vperm.xlu0 %785, %v510
        %v787 = vpop.permute.xlu0 %786
        %vm788 = vcmp.eq.s32.totalorder %v766, %v515
        %vm789 = vcmp.eq.s32.totalorder %v769, %v515
        %vm790 = vcmp.eq.s32.totalorder %v772, %v515
        %vm791 = vcmp.eq.s32.totalorder %v775, %v515
        %vm792 = vcmp.eq.s32.totalorder %v778, %v515
        %vm793 = vcmp.eq.s32.totalorder %v781, %v515
        %vm794 = vcmp.eq.s32.totalorder %v784, %v515
        %vm795 = vcmp.eq.s32.totalorder %v787, %v515
        %796 = vset.pattern.permute.xlu0 3
        %797 = vperm.xlu0 %796, %v495
        %v798 = vpop.permute.xlu0 %797
        %800 = vset.pattern.permute.xlu0 3
        %801 = vperm.xlu0 %800, %v496
        %v802 = vpop.permute.xlu0 %801
        %804 = vset.pattern.permute.xlu0 3
        %805 = vperm.xlu0 %804, %v497
        %v806 = vpop.permute.xlu0 %805
        %808 = vset.pattern.permute.xlu0 3
        %809 = vperm.xlu0 %808, %v498
        %v810 = vpop.permute.xlu0 %809
        %812 = vset.pattern.permute.xlu0 3
        %813 = vperm.xlu0 %812, %v499
        %v814 = vpop.permute.xlu0 %813
        %816 = vset.pattern.permute.xlu0 3
        %817 = vperm.xlu0 %816, %v500
        %v818 = vpop.permute.xlu0 %817
        %820 = vset.pattern.permute.xlu0 3
        %821 = vperm.xlu0 %820, %v501
        %v822 = vpop.permute.xlu0 %821
        %824 = vset.pattern.permute.xlu0 3
        %825 = vperm.xlu0 %824, %v502
        %v826 = vpop.permute.xlu0 %825
        %v828 = vsel %vm788, %v798, 0.0
        %v829 = vsel %vm789, %v802, 0.0
        %v830 = vsel %vm790, %v806, 0.0
        %v831 = vsel %vm791, %v810, 0.0
        %v832 = vsel %vm792, %v814, 0.0
        %v833 = vsel %vm793, %v818, 0.0
        %v834 = vsel %vm794, %v822, 0.0
        %v835 = vsel %vm795, %v826, 0.0
        %v836 = vadd.f32 %v756, %v828
        %v837 = vadd.f32 %v757, %v829
        %v838 = vadd.f32 %v758, %v830
        %v839 = vadd.f32 %v759, %v831
        %v840 = vadd.f32 %v760, %v832
        %v841 = vadd.f32 %v761, %v833
        %v842 = vadd.f32 %v762, %v834
        %v843 = vadd.f32 %v763, %v835
        %844 = vset.pattern.permute.xlu0 4
        %845 = vperm.xlu0 %844, %v503
        %v846 = vpop.permute.xlu0 %845
        %847 = vset.pattern.permute.xlu0 4
        %848 = vperm.xlu0 %847, %v504
        %v849 = vpop.permute.xlu0 %848
        %850 = vset.pattern.permute.xlu0 4
        %851 = vperm.xlu0 %850, %v505
        %v852 = vpop.permute.xlu0 %851
        %853 = vset.pattern.permute.xlu0 4
        %854 = vperm.xlu0 %853, %v506
        %v855 = vpop.permute.xlu0 %854
        %856 = vset.pattern.permute.xlu0 4
        %857 = vperm.xlu0 %856, %v507
        %v858 = vpop.permute.xlu0 %857
        %859 = vset.pattern.permute.xlu0 4
        %860 = vperm.xlu0 %859, %v508
        %v861 = vpop.permute.xlu0 %860
        %862 = vset.pattern.permute.xlu0 4
        %863 = vperm.xlu0 %862, %v509
        %v864 = vpop.permute.xlu0 %863
        %865 = vset.pattern.permute.xlu0 4
        %866 = vperm.xlu0 %865, %v510
        %v867 = vpop.permute.xlu0 %866
        %vm868 = vcmp.eq.s32.totalorder %v846, %v515
        %vm869 = vcmp.eq.s32.totalorder %v849, %v515
        %vm870 = vcmp.eq.s32.totalorder %v852, %v515
        %vm871 = vcmp.eq.s32.totalorder %v855, %v515
        %vm872 = vcmp.eq.s32.totalorder %v858, %v515
        %vm873 = vcmp.eq.s32.totalorder %v861, %v515
        %vm874 = vcmp.eq.s32.totalorder %v864, %v515
        %vm875 = vcmp.eq.s32.totalorder %v867, %v515
        %876 = vset.pattern.permute.xlu0 4
        %877 = vperm.xlu0 %876, %v495
        %v878 = vpop.permute.xlu0 %877
        %880 = vset.pattern.permute.xlu0 4
        %881 = vperm.xlu0 %880, %v496
        %v882 = vpop.permute.xlu0 %881
        %884 = vset.pattern.permute.xlu0 4
        %885 = vperm.xlu0 %884, %v497
        %v886 = vpop.permute.xlu0 %885
        %888 = vset.pattern.permute.xlu0 4
        %889 = vperm.xlu0 %888, %v498
        %v890 = vpop.permute.xlu0 %889
        %892 = vset.pattern.permute.xlu0 4
        %893 = vperm.xlu0 %892, %v499
        %v894 = vpop.permute.xlu0 %893
        %896 = vset.pattern.permute.xlu0 4
        %897 = vperm.xlu0 %896, %v500
        %v898 = vpop.permute.xlu0 %897
        %900 = vset.pattern.permute.xlu0 4
        %901 = vperm.xlu0 %900, %v501
        %v902 = vpop.permute.xlu0 %901
        %904 = vset.pattern.permute.xlu0 4
        %905 = vperm.xlu0 %904, %v502
        %v906 = vpop.permute.xlu0 %905
        %v908 = vsel %vm868, %v878, 0.0
        %v909 = vsel %vm869, %v882, 0.0
        %v910 = vsel %vm870, %v886, 0.0
        %v911 = vsel %vm871, %v890, 0.0
        %v912 = vsel %vm872, %v894, 0.0
        %v913 = vsel %vm873, %v898, 0.0
        %v914 = vsel %vm874, %v902, 0.0
        %v915 = vsel %vm875, %v906, 0.0
        %v916 = vadd.f32 %v836, %v908
        %v917 = vadd.f32 %v837, %v909
        %v918 = vadd.f32 %v838, %v910
        %v919 = vadd.f32 %v839, %v911
        %v920 = vadd.f32 %v840, %v912
        %v921 = vadd.f32 %v841, %v913
        %v922 = vadd.f32 %v842, %v914
        %v923 = vadd.f32 %v843, %v915
        %924 = vset.pattern.permute.xlu0 5
        %925 = vperm.xlu0 %924, %v503
        %v926 = vpop.permute.xlu0 %925
        %927 = vset.pattern.permute.xlu0 5
        %928 = vperm.xlu0 %927, %v504
        %v929 = vpop.permute.xlu0 %928
        %930 = vset.pattern.permute.xlu0 5
        %931 = vperm.xlu0 %930, %v505
        %v932 = vpop.permute.xlu0 %931
        %933 = vset.pattern.permute.xlu0 5
        %934 = vperm.xlu0 %933, %v506
        %v935 = vpop.permute.xlu0 %934
        %936 = vset.pattern.permute.xlu0 5
        %937 = vperm.xlu0 %936, %v507
        %v938 = vpop.permute.xlu0 %937
        %939 = vset.pattern.permute.xlu0 5
        %940 = vperm.xlu0 %939, %v508
        %v941 = vpop.permute.xlu0 %940
        %942 = vset.pattern.permute.xlu0 5
        %943 = vperm.xlu0 %942, %v509
        %v944 = vpop.permute.xlu0 %943
        %945 = vset.pattern.permute.xlu0 5
        %946 = vperm.xlu0 %945, %v510
        %v947 = vpop.permute.xlu0 %946
        %vm948 = vcmp.eq.s32.totalorder %v926, %v515
        %vm949 = vcmp.eq.s32.totalorder %v929, %v515
        %vm950 = vcmp.eq.s32.totalorder %v932, %v515
        %vm951 = vcmp.eq.s32.totalorder %v935, %v515
        %vm952 = vcmp.eq.s32.totalorder %v938, %v515
        %vm953 = vcmp.eq.s32.totalorder %v941, %v515
        %vm954 = vcmp.eq.s32.totalorder %v944, %v515
        %vm955 = vcmp.eq.s32.totalorder %v947, %v515
        %956 = vset.pattern.permute.xlu0 5
        %957 = vperm.xlu0 %956, %v495
        %v958 = vpop.permute.xlu0 %957
        %960 = vset.pattern.permute.xlu0 5
        %961 = vperm.xlu0 %960, %v496
        %v962 = vpop.permute.xlu0 %961
        %964 = vset.pattern.permute.xlu0 5
        %965 = vperm.xlu0 %964, %v497
        %v966 = vpop.permute.xlu0 %965
        %968 = vset.pattern.permute.xlu0 5
        %969 = vperm.xlu0 %968, %v498
        %v970 = vpop.permute.xlu0 %969
        %972 = vset.pattern.permute.xlu0 5
        %973 = vperm.xlu0 %972, %v499
        %v974 = vpop.permute.xlu0 %973
        %976 = vset.pattern.permute.xlu0 5
        %977 = vperm.xlu0 %976, %v500
        %v978 = vpop.permute.xlu0 %977
        %980 = vset.pattern.permute.xlu0 5
        %981 = vperm.xlu0 %980, %v501
        %v982 = vpop.permute.xlu0 %981
        %984 = vset.pattern.permute.xlu0 5
        %985 = vperm.xlu0 %984, %v502
        %v986 = vpop.permute.xlu0 %985
        %v988 = vsel %vm948, %v958, 0.0
        %v989 = vsel %vm949, %v962, 0.0
        %v990 = vsel %vm950, %v966, 0.0
        %v991 = vsel %vm951, %v970, 0.0
        %v992 = vsel %vm952, %v974, 0.0
        %v993 = vsel %vm953, %v978, 0.0
        %v994 = vsel %vm954, %v982, 0.0
        %v995 = vsel %vm955, %v986, 0.0
        %v996 = vadd.f32 %v916, %v988
        %v997 = vadd.f32 %v917, %v989
        %v998 = vadd.f32 %v918, %v990
        %v999 = vadd.f32 %v919, %v991
        %v1000 = vadd.f32 %v920, %v992
        %v1001 = vadd.f32 %v921, %v993
        %v1002 = vadd.f32 %v922, %v994
        %v1003 = vadd.f32 %v923, %v995
        %1004 = vset.pattern.permute.xlu0 6
        %1005 = vperm.xlu0 %1004, %v503
        %v1006 = vpop.permute.xlu0 %1005
        %1007 = vset.pattern.permute.xlu0 6
        %1008 = vperm.xlu0 %1007, %v504
        %v1009 = vpop.permute.xlu0 %1008
        %1010 = vset.pattern.permute.xlu0 6
        %1011 = vperm.xlu0 %1010, %v505
        %v1012 = vpop.permute.xlu0 %1011
        %1013 = vset.pattern.permute.xlu0 6
        %1014 = vperm.xlu0 %1013, %v506
        %v1015 = vpop.permute.xlu0 %1014
        %1016 = vset.pattern.permute.xlu0 6
        %1017 = vperm.xlu0 %1016, %v507
        %v1018 = vpop.permute.xlu0 %1017
        %1019 = vset.pattern.permute.xlu0 6
        %1020 = vperm.xlu0 %1019, %v508
        %v1021 = vpop.permute.xlu0 %1020
        %1022 = vset.pattern.permute.xlu0 6
        %1023 = vperm.xlu0 %1022, %v509
        %v1024 = vpop.permute.xlu0 %1023
        %1025 = vset.pattern.permute.xlu0 6
        %1026 = vperm.xlu0 %1025, %v510
        %v1027 = vpop.permute.xlu0 %1026
        %vm1028 = vcmp.eq.s32.totalorder %v1006, %v515
        %vm1029 = vcmp.eq.s32.totalorder %v1009, %v515
        %vm1030 = vcmp.eq.s32.totalorder %v1012, %v515
        %vm1031 = vcmp.eq.s32.totalorder %v1015, %v515
        %vm1032 = vcmp.eq.s32.totalorder %v1018, %v515
        %vm1033 = vcmp.eq.s32.totalorder %v1021, %v515
        %vm1034 = vcmp.eq.s32.totalorder %v1024, %v515
        %vm1035 = vcmp.eq.s32.totalorder %v1027, %v515
        %1036 = vset.pattern.permute.xlu0 6
        %1037 = vperm.xlu0 %1036, %v495
        %v1038 = vpop.permute.xlu0 %1037
        %1040 = vset.pattern.permute.xlu0 6
        %1041 = vperm.xlu0 %1040, %v496
        %v1042 = vpop.permute.xlu0 %1041
        %1044 = vset.pattern.permute.xlu0 6
        %1045 = vperm.xlu0 %1044, %v497
        %v1046 = vpop.permute.xlu0 %1045
        %1048 = vset.pattern.permute.xlu0 6
        %1049 = vperm.xlu0 %1048, %v498
        %v1050 = vpop.permute.xlu0 %1049
        %1052 = vset.pattern.permute.xlu0 6
        %1053 = vperm.xlu0 %1052, %v499
        %v1054 = vpop.permute.xlu0 %1053
        %1056 = vset.pattern.permute.xlu0 6
        %1057 = vperm.xlu0 %1056, %v500
        %v1058 = vpop.permute.xlu0 %1057
        %1060 = vset.pattern.permute.xlu0 6
        %1061 = vperm.xlu0 %1060, %v501
        %v1062 = vpop.permute.xlu0 %1061
        %1064 = vset.pattern.permute.xlu0 6
        %1065 = vperm.xlu0 %1064, %v502
        %v1066 = vpop.permute.xlu0 %1065
        %v1068 = vsel %vm1028, %v1038, 0.0
        %v1069 = vsel %vm1029, %v1042, 0.0
        %v1070 = vsel %vm1030, %v1046, 0.0
        %v1071 = vsel %vm1031, %v1050, 0.0
        %v1072 = vsel %vm1032, %v1054, 0.0
        %v1073 = vsel %vm1033, %v1058, 0.0
        %v1074 = vsel %vm1034, %v1062, 0.0
        %v1075 = vsel %vm1035, %v1066, 0.0
        %v1076 = vadd.f32 %v996, %v1068
        %v1077 = vadd.f32 %v997, %v1069
        %v1078 = vadd.f32 %v998, %v1070
        %v1079 = vadd.f32 %v999, %v1071
        %v1080 = vadd.f32 %v1000, %v1072
        %v1081 = vadd.f32 %v1001, %v1073
        %v1082 = vadd.f32 %v1002, %v1074
        %v1083 = vadd.f32 %v1003, %v1075
        %1084 = vset.pattern.permute.xlu0 7
        %1085 = vperm.xlu0 %1084, %v503
        %v1086 = vpop.permute.xlu0 %1085
        %1087 = vset.pattern.permute.xlu0 7
        %1088 = vperm.xlu0 %1087, %v504
        %v1089 = vpop.permute.xlu0 %1088
        %1090 = vset.pattern.permute.xlu0 7
        %1091 = vperm.xlu0 %1090, %v505
        %v1092 = vpop.permute.xlu0 %1091
        %1093 = vset.pattern.permute.xlu0 7
        %1094 = vperm.xlu0 %1093, %v506
        %v1095 = vpop.permute.xlu0 %1094
        %1096 = vset.pattern.permute.xlu0 7
        %1097 = vperm.xlu0 %1096, %v507
        %v1098 = vpop.permute.xlu0 %1097
        %1099 = vset.pattern.permute.xlu0 7
        %1100 = vperm.xlu0 %1099, %v508
        %v1101 = vpop.permute.xlu0 %1100
        %1102 = vset.pattern.permute.xlu0 7
        %1103 = vperm.xlu0 %1102, %v509
        %v1104 = vpop.permute.xlu0 %1103
        %1105 = vset.pattern.permute.xlu0 7
        %1106 = vperm.xlu0 %1105, %v510
        %v1107 = vpop.permute.xlu0 %1106
        %vm1108 = vcmp.eq.s32.totalorder %v1086, %v515
        %vm1109 = vcmp.eq.s32.totalorder %v1089, %v515
        %vm1110 = vcmp.eq.s32.totalorder %v1092, %v515
        %vm1111 = vcmp.eq.s32.totalorder %v1095, %v515
        %vm1112 = vcmp.eq.s32.totalorder %v1098, %v515
        %vm1113 = vcmp.eq.s32.totalorder %v1101, %v515
        %vm1114 = vcmp.eq.s32.totalorder %v1104, %v515
        %vm1115 = vcmp.eq.s32.totalorder %v1107, %v515
        %1116 = vset.pattern.permute.xlu0 7
        %1117 = vperm.xlu0 %1116, %v495
        %v1118 = vpop.permute.xlu0 %1117
        %1120 = vset.pattern.permute.xlu0 7
        %1121 = vperm.xlu0 %1120, %v496
        %v1122 = vpop.permute.xlu0 %1121
        %1124 = vset.pattern.permute.xlu0 7
        %1125 = vperm.xlu0 %1124, %v497
        %v1126 = vpop.permute.xlu0 %1125
        %1128 = vset.pattern.permute.xlu0 7
        %1129 = vperm.xlu0 %1128, %v498
        %v1130 = vpop.permute.xlu0 %1129
        %1132 = vset.pattern.permute.xlu0 7
        %1133 = vperm.xlu0 %1132, %v499
        %v1134 = vpop.permute.xlu0 %1133
        %1136 = vset.pattern.permute.xlu0 7
        %1137 = vperm.xlu0 %1136, %v500
        %v1138 = vpop.permute.xlu0 %1137
        %1140 = vset.pattern.permute.xlu0 7
        %1141 = vperm.xlu0 %1140, %v501
        %v1142 = vpop.permute.xlu0 %1141
        %1144 = vset.pattern.permute.xlu0 7
        %1145 = vperm.xlu0 %1144, %v502
        %v1146 = vpop.permute.xlu0 %1145
        %v1148 = vsel %vm1108, %v1118, 0.0
        %v1149 = vsel %vm1109, %v1122, 0.0
        %v1150 = vsel %vm1110, %v1126, 0.0
        %v1151 = vsel %vm1111, %v1130, 0.0
        %v1152 = vsel %vm1112, %v1134, 0.0
        %v1153 = vsel %vm1113, %v1138, 0.0
        %v1154 = vsel %vm1114, %v1142, 0.0
        %v1155 = vsel %vm1115, %v1146, 0.0
        %v1156 = vadd.f32 %v1076, %v1148
        %v1157 = vadd.f32 %v1077, %v1149
        %v1158 = vadd.f32 %v1078, %v1150
        %v1159 = vadd.f32 %v1079, %v1151
        %v1160 = vadd.f32 %v1080, %v1152
        %v1161 = vadd.f32 %v1081, %v1153
        %v1162 = vadd.f32 %v1082, %v1154
        %v1163 = vadd.f32 %v1083, %v1155
        %v1164 = vld [vmem:[#allocation2] sm:$0xff]
        %v1165 = vld [vmem:[#allocation2 + $0x8] sm:$0xff]
        %v1166 = vld [vmem:[#allocation2 + $0x10] sm:$0xff]
        %v1167 = vld [vmem:[#allocation2 + $0x18] sm:$0xff]
        %v1168 = vld [vmem:[#allocation2 + $0x20] sm:$0xff]
        %v1169 = vld [vmem:[#allocation2 + $0x28] sm:$0xff]
        %v1170 = vld [vmem:[#allocation2 + $0x30] sm:$0xff]
        %v1171 = vld [vmem:[#allocation2 + $0x38] sm:$0xff]
        %v1172 = vld [vmem:[%s404] sm:$0xff]
        %v1173 = vld [vmem:[%s404 + $0x8] sm:$0xff]
        %v1174 = vld [vmem:[%s404 + $0x10] sm:$0xff]
        %v1175 = vld [vmem:[%s404 + $0x18] sm:$0xff]
        %v1176 = vld [vmem:[%s404 + $0x20] sm:$0xff]
        %v1177 = vld [vmem:[%s404 + $0x28] sm:$0xff]
        %v1178 = vld [vmem:[%s404 + $0x30] sm:$0xff]
        %v1179 = vld [vmem:[%s404 + $0x38] sm:$0xff]
        %v1180 = vld [vmem:[%s404 + $0x40] sm:$0xff]
        %v1181 = vld [vmem:[%s404 + $0x48] sm:$0xff]
        %v1182 = vld [vmem:[%s404 + $0x50] sm:$0xff]
        %v1183 = vld [vmem:[%s404 + $0x58] sm:$0xff]
        %v1184 = vld [vmem:[%s404 + $0x60] sm:$0xff]
        %v1185 = vld [vmem:[%s404 + $0x68] sm:$0xff]
        %v1186 = vld [vmem:[%s404 + $0x70] sm:$0xff]
        %v1187 = vld [vmem:[%s404 + $0x78] sm:$0xff]
        %1188 = vmatprep.subr.mxu0 0.0
        %1189 = vmatpush1.msra.mxu0 %v1172
        %1190 = vmatprep.subr.mxu0 0.0
        %1191 = vmatpush1.msra.mxu0 %v1173
        %1192 = vmatprep.subr.mxu0 0.0
        %1193 = vmatpush1.msra.mxu0 %v1174
        %1194 = vmatprep.subr.mxu0 0.0
        %1195 = vmatpush1.msra.mxu0 %v1175
        %1196 = vmatprep.subr.mxu0 0.0
        %1197 = vmatpush1.msra.mxu0 %v1176
        %1198 = vmatprep.subr.mxu0 0.0
        %1199 = vmatpush1.msra.mxu0 %v1177
        %1200 = vmatprep.subr.mxu0 0.0
        %1201 = vmatpush1.msra.mxu0 %v1178
        %1202 = vmatprep.subr.mxu0 0.0
        %1203 = vmatpush1.msra.mxu0 %v1179
        %1204 = vmatprep.subr.mxu0 0.0
        %1205 = vmatpush1.msra.mxu0 %v1180
        %1206 = vmatprep.subr.mxu0 0.0
        %1207 = vmatpush1.msra.mxu0 %v1181
        %1208 = vmatprep.subr.mxu0 0.0
        %1209 = vmatpush1.msra.mxu0 %v1182
        %1210 = vmatprep.subr.mxu0 0.0
        %1211 = vmatpush1.msra.mxu0 %v1183
        %1212 = vmatprep.subr.mxu0 0.0
        %1213 = vmatpush1.msra.mxu0 %v1184
        %1214 = vmatprep.subr.mxu0 0.0
        %1215 = vmatpush1.msra.mxu0 %v1185
        %1216 = vmatprep.subr.mxu0 0.0
        %1217 = vmatpush1.msra.mxu0 %v1186
        %1218 = vmatprep.subr.mxu0 0.0
        %1219 = vmatpush1.msra.mxu0 %v1187
        %1220 = vmatprep.subr.mxu0 0.0
        %1221 = vmatpush1.msra.mxu0 0.0
        %1222 = vmatprep.subr.mxu0 0.0
        %1223 = vmatpush1.msra.mxu0 0.0
        %1224 = vmatprep.subr.mxu0 0.0
        %1225 = vmatpush1.msra.mxu0 0.0
        %1226 = vmatprep.subr.mxu0 0.0
        %1227 = vmatpush1.msra.mxu0 0.0
        %1228 = vmatprep.subr.mxu0 0.0
        %1229 = vmatpush1.msra.mxu0 0.0
        %1230 = vmatprep.subr.mxu0 0.0
        %1231 = vmatpush1.msra.mxu0 0.0
        %1232 = vmatprep.subr.mxu0 0.0
        %1233 = vmatpush1.msra.mxu0 0.0
        %1234 = vmatprep.subr.mxu0 0.0
        %1235 = vmatpush1.msra.mxu0 0.0
        %1236 = vmatprep.subr.mxu0 0.0
        %1237 = vmatpush1.msra.mxu0 0.0
        %1238 = vmatprep.subr.mxu0 0.0
        %1239 = vmatpush1.msra.mxu0 0.0
        %1240 = vmatprep.subr.mxu0 0.0
        %1241 = vmatpush1.msra.mxu0 0.0
        %1242 = vmatprep.subr.mxu0 0.0
        %1243 = vmatpush1.msra.mxu0 0.0
        %1244 = vmatprep.subr.mxu0 0.0
        %1245 = vmatpush1.msra.mxu0 0.0
        %1246 = vmatprep.subr.mxu0 0.0
        %1247 = vmatpush1.msra.mxu0 0.0
        %1248 = vmatprep.subr.mxu0 0.0
        %1249 = vmatpush1.msra.mxu0 0.0
        %1250 = vmatprep.subr.mxu0 0.0
        %1251 = vmatpush1.msra.mxu0 0.0
        %1252 = vmatprep.mubr.f32.mxu0 0.0
        %1253 = vmatmul.mubr.f32.gmra.mrb[0].mxu0 %v1156
        %v1254 = vpop.f32.mrb[0].mxu0
        %v1255 = vadd.f32 0.0, %v1254
        %v1256 = vpop.f32.mrb[0].mxu0
        %1257 = vmatprep.mubr.f32.mxu0 0.0
        %1258 = vmatmul.mubr.f32.gmra.mrb[0].mxu0 %v1157
        %v1259 = vpop.f32.mrb[0].mxu0
        %v1260 = vadd.f32 0.0, %v1259
        %v1261 = vpop.f32.mrb[0].mxu0
        %1262 = vmatprep.mubr.f32.mxu0 0.0
        %1263 = vmatmul.mubr.f32.gmra.mrb[0].mxu0 %v1158
        %v1264 = vpop.f32.mrb[0].mxu0
        %v1265 = vadd.f32 0.0, %v1264
        %v1266 = vpop.f32.mrb[0].mxu0
        %1267 = vmatprep.mubr.f32.mxu0 0.0
        %1268 = vmatmul.mubr.f32.gmra.mrb[0].mxu0 %v1159
        %v1269 = vpop.f32.mrb[0].mxu0
        %v1270 = vadd.f32 0.0, %v1269
        %v1271 = vpop.f32.mrb[0].mxu0
        %1272 = vmatprep.mubr.f32.mxu0 0.0
        %1273 = vmatmul.mubr.f32.gmra.mrb[0].mxu0 %v1160
        %v1274 = vpop.f32.mrb[0].mxu0
        %v1275 = vadd.f32 0.0, %v1274
        %v1276 = vpop.f32.mrb[0].mxu0
        %1277 = vmatprep.mubr.f32.mxu0 0.0
        %1278 = vmatmul.mubr.f32.gmra.mrb[0].mxu0 %v1161
        %v1279 = vpop.f32.mrb[0].mxu0
        %v1280 = vadd.f32 0.0, %v1279
        %v1281 = vpop.f32.mrb[0].mxu0
        %1282 = vmatprep.mubr.f32.mxu0 0.0
        %1283 = vmatmul.mubr.f32.gmra.mrb[0].mxu0 %v1162
        %v1284 = vpop.f32.mrb[0].mxu0
        %v1285 = vadd.f32 0.0, %v1284
        %v1286 = vpop.f32.mrb[0].mxu0
        %1287 = vmatprep.mubr.f32.mxu0 0.0
        %1288 = vmatmul.mubr.f32.gmra.mrb[0].mxu0 %v1163
        %v1289 = vpop.f32.mrb[0].mxu0
        %v1290 = vadd.f32 0.0, %v1289
        %v1291 = vpop.f32.mrb[0].mxu0
        %1292 = vdwg.mxu0
        %v1293 = vadd.f32 %v1164, %v1255
        %v1294 = vadd.f32 %v1165, %v1260
        %v1295 = vadd.f32 %v1166, %v1265
        %v1296 = vadd.f32 %v1167, %v1270
        %v1297 = vadd.f32 %v1168, %v1275
        %v1298 = vadd.f32 %v1169, %v1280
        %v1299 = vadd.f32 %v1170, %v1285
        %v1300 = vadd.f32 %v1171, %v1290
        %1301 = vst [vmem:[#allocation2] sm:$0xff] %v1293
        %1302 = vst [vmem:[#allocation2 + $0x8] sm:$0xff] %v1294
        %1303 = vst [vmem:[#allocation2 + $0x10] sm:$0xff] %v1295
        %1304 = vst [vmem:[#allocation2 + $0x18] sm:$0xff] %v1296
        %1305 = vst [vmem:[#allocation2 + $0x20] sm:$0xff] %v1297
        %1306 = vst [vmem:[#allocation2 + $0x28] sm:$0xff] %v1298
        %1307 = vst [vmem:[#allocation2 + $0x30] sm:$0xff] %v1299
        %1308 = vst [vmem:[#allocation2 + $0x38] sm:$0xff] %v1300
        %p1309 = scmp.eq.s32.totalorder %s37, 1
        // Predicated region
        $region73: #{tpu_custom_call.1} parent=43 // pred_check
          %p1310 = pneg %p1309
        $region74: #{tpu_custom_call.1} parent=43 // pred_check_branch
          %1312 = sbr.rel (%p1310) target = $region76
        $region75: #{tpu_custom_call.1} parent=43 // pred_region
          %v1313 = vld [vmem:[#allocation2] sm:$0xff]
          %v1314 = vld [vmem:[#allocation2 + $0x8] sm:$0xff]
          %v1315 = vld [vmem:[#allocation2 + $0x10] sm:$0xff]
          %v1316 = vld [vmem:[#allocation2 + $0x18] sm:$0xff]
          %v1317 = vld [vmem:[#allocation2 + $0x20] sm:$0xff]
          %v1318 = vld [vmem:[#allocation2 + $0x28] sm:$0xff]
          %v1319 = vld [vmem:[#allocation2 + $0x30] sm:$0xff]
          %v1320 = vld [vmem:[#allocation2 + $0x38] sm:$0xff]
          %v1321 = vld [vmem:[%s395] sm:$0xff]
          %v1322 = vld [vmem:[%s395 + $0x8] sm:$0xff]
          %v1323 = vld [vmem:[%s395 + $0x10] sm:$0xff]
          %v1324 = vld [vmem:[%s395 + $0x18] sm:$0xff]
          %v1325 = vld [vmem:[%s395 + $0x20] sm:$0xff]
          %v1326 = vld [vmem:[%s395 + $0x28] sm:$0xff]
          %v1327 = vld [vmem:[%s395 + $0x30] sm:$0xff]
          %v1328 = vld [vmem:[%s395 + $0x38] sm:$0xff]
          %1330 = vset.pattern.permute.xlu0 0
          %1331 = vperm.xlu0 %1330, %v1321
          %v1332 = vpop.permute.xlu0 %1331
          %1335 = vset.pattern.permute.xlu0 0
          %1336 = vperm.xlu0 %1335, %v1322
          %v1337 = vpop.permute.xlu0 %1336
          %1340 = vset.pattern.permute.xlu0 0
          %1341 = vperm.xlu0 %1340, %v1323
          %v1342 = vpop.permute.xlu0 %1341
          %1345 = vset.pattern.permute.xlu0 0
          %1346 = vperm.xlu0 %1345, %v1324
          %v1347 = vpop.permute.xlu0 %1346
          %1350 = vset.pattern.permute.xlu0 0
          %1351 = vperm.xlu0 %1350, %v1325
          %v1352 = vpop.permute.xlu0 %1351
          %1355 = vset.pattern.permute.xlu0 0
          %1356 = vperm.xlu0 %1355, %v1326
          %v1357 = vpop.permute.xlu0 %1356
          %1360 = vset.pattern.permute.xlu0 0
          %1361 = vperm.xlu0 %1360, %v1327
          %v1362 = vpop.permute.xlu0 %1361
          %1365 = vset.pattern.permute.xlu0 0
          %1366 = vperm.xlu0 %1365, %v1328
          %v1367 = vpop.permute.xlu0 %1366
          %v1369 = vrcp.pop %v1332
          %v1370 = vmul.f32 %v1313, %v1369
          %v1371 = vrcp.pop %v1337
          %v1372 = vmul.f32 %v1314, %v1371
          %v1373 = vrcp.pop %v1342
          %v1374 = vmul.f32 %v1315, %v1373
          %v1375 = vrcp.pop %v1347
          %v1376 = vmul.f32 %v1316, %v1375
          %v1377 = vrcp.pop %v1352
          %v1378 = vmul.f32 %v1317, %v1377
          %v1379 = vrcp.pop %v1357
          %v1380 = vmul.f32 %v1318, %v1379
          %v1381 = vrcp.pop %v1362
          %v1382 = vmul.f32 %v1319, %v1381
          %v1383 = vrcp.pop %v1367
          %v1384 = vmul.f32 %v1320, %v1383
          %v1385 = vld [vmem:[%s422] sm:$0xff]
          %v1386 = vld [vmem:[%s422 + $0x8] sm:$0xff]
          %v1387 = vld [vmem:[%s422 + $0x10] sm:$0xff]
          %v1388 = vld [vmem:[%s422 + $0x18] sm:$0xff]
          %v1389 = vld [vmem:[%s422 + $0x20] sm:$0xff]
          %v1390 = vld [vmem:[%s422 + $0x28] sm:$0xff]
          %v1391 = vld [vmem:[%s422 + $0x30] sm:$0xff]
          %v1392 = vld [vmem:[%s422 + $0x38] sm:$0xff]
          %vm1393 = vcmp.gt.f32.partialorder %v1385, 0.0
          %vm1394 = vcmp.gt.f32.partialorder %v1386, 0.0
          %vm1395 = vcmp.gt.f32.partialorder %v1387, 0.0
          %vm1396 = vcmp.gt.f32.partialorder %v1388, 0.0
          %vm1397 = vcmp.gt.f32.partialorder %v1389, 0.0
          %vm1398 = vcmp.gt.f32.partialorder %v1390, 0.0
          %vm1399 = vcmp.gt.f32.partialorder %v1391, 0.0
          %vm1400 = vcmp.gt.f32.partialorder %v1392, 0.0
          %v1401 = vld [vmem:[%s413] sm:$0xff]
          %v1402 = vld [vmem:[%s413 + $0x8] sm:$0xff]
          %v1403 = vld [vmem:[%s413 + $0x10] sm:$0xff]
          %v1404 = vld [vmem:[%s413 + $0x18] sm:$0xff]
          %v1405 = vld [vmem:[%s413 + $0x20] sm:$0xff]
          %v1406 = vld [vmem:[%s413 + $0x28] sm:$0xff]
          %v1407 = vld [vmem:[%s413 + $0x30] sm:$0xff]
          %v1408 = vld [vmem:[%s413 + $0x38] sm:$0xff]
          %v1409 = vsel %vm1393, 1, 0
          %v1410 = vsel %vm1394, 1, 0
          %v1411 = vsel %vm1395, 1, 0
          %v1412 = vsel %vm1396, 1, 0
          %v1413 = vsel %vm1397, 1, 0
          %v1414 = vsel %vm1398, 1, 0
          %v1415 = vsel %vm1399, 1, 0
          %v1416 = vsel %vm1400, 1, 0
          %1417 = vset.pattern.permute.xlu0 0
          %1418 = vperm.xlu0 %1417, %v1409
          %v1419 = vpop.permute.xlu0 %1418
          %1420 = vset.pattern.permute.xlu0 0
          %1421 = vperm.xlu0 %1420, %v1410
          %v1422 = vpop.permute.xlu0 %1421
          %1423 = vset.pattern.permute.xlu0 0
          %1424 = vperm.xlu0 %1423, %v1411
          %v1425 = vpop.permute.xlu0 %1424
          %1426 = vset.pattern.permute.xlu0 0
          %1427 = vperm.xlu0 %1426, %v1412
          %v1428 = vpop.permute.xlu0 %1427
          %1429 = vset.pattern.permute.xlu0 0
          %1430 = vperm.xlu0 %1429, %v1413
          %v1431 = vpop.permute.xlu0 %1430
          %1432 = vset.pattern.permute.xlu0 0
          %1433 = vperm.xlu0 %1432, %v1414
          %v1434 = vpop.permute.xlu0 %1433
          %1435 = vset.pattern.permute.xlu0 0
          %1436 = vperm.xlu0 %1435, %v1415
          %v1437 = vpop.permute.xlu0 %1436
          %1438 = vset.pattern.permute.xlu0 0
          %1439 = vperm.xlu0 %1438, %v1416
          %v1440 = vpop.permute.xlu0 %1439
          %vm1441 = vcmp.eq.s32.totalorder %v1419, 1
          %vm1442 = vcmp.eq.s32.totalorder %v1422, 1
          %vm1443 = vcmp.eq.s32.totalorder %v1425, 1
          %vm1444 = vcmp.eq.s32.totalorder %v1428, 1
          %vm1445 = vcmp.eq.s32.totalorder %v1431, 1
          %vm1446 = vcmp.eq.s32.totalorder %v1434, 1
          %vm1447 = vcmp.eq.s32.totalorder %v1437, 1
          %vm1448 = vcmp.eq.s32.totalorder %v1440, 1
          %v1449 = vsel %vm1441, %v1401, %v1370
          %v1450 = vsel %vm1442, %v1402, %v1372
          %v1451 = vsel %vm1443, %v1403, %v1374
          %v1452 = vsel %vm1444, %v1404, %v1376
          %v1453 = vsel %vm1445, %v1405, %v1378
          %v1454 = vsel %vm1446, %v1406, %v1380
          %v1455 = vsel %vm1447, %v1407, %v1382
          %v1456 = vsel %vm1448, %v1408, %v1384
          %1457 = vst [vmem:[%s475] sm:$0xff] %v1449
          %1458 = vst [vmem:[%s475 + $0x8] sm:$0xff] %v1450
          %1459 = vst [vmem:[%s475 + $0x10] sm:$0xff] %v1451
          %1460 = vst [vmem:[%s475 + $0x18] sm:$0xff] %v1452
          %1461 = vst [vmem:[%s475 + $0x20] sm:$0xff] %v1453
          %1462 = vst [vmem:[%s475 + $0x28] sm:$0xff] %v1454
          %1463 = vst [vmem:[%s475 + $0x30] sm:$0xff] %v1455
          %1464 = vst [vmem:[%s475 + $0x38] sm:$0xff] %v1456
        $region76: #{tpu_custom_call.1} parent=43 // pred_fallthru
          _
        %s1465 = sand.u32 %s208, 1
        %s1466 = scalar_lea.sflag [#allocation5], %s1465
        %s1467 = sand.u32 %s208, 1
        %s1468 = smul.addr %s1467, 64
        %s1469 = scalar_lea.vmem [#allocation14], %s1468
        // Predicated region
        $region77: #{tpu_custom_call.1} parent=43 // pred_check
          %p1470 = pneg %p218
        $region78: #{tpu_custom_call.1} parent=43 // pred_check_branch
          %1472 = sbr.rel (%p1470) target = $region80
        $region79: #{tpu_custom_call.1} parent=43 // pred_region
          %s1473 = smul.u32 8, %s36
          %s1475 = ssub.s32 1024, 1024
          %1476 = vsyncadd %s1466, %s1475
          %s1477 = smul.addr %s1473, 128
          %s1478 = scalar_lea.hbm %s6, %s1477
          %s1479 = sshll.u32 %s1469, 4
          %s1480 = int_to_ptr.vmem [resolvable:$true] %s1479
          %1485 = dma.vmem_to_hbm [thread:$0]  %s1480, 1024, %s1478, %s1466, 128, 128, 8
        $region80: #{tpu_custom_call.1} parent=43 // pred_fallthru
          _
      $region44: #{tpu_custom_call.1} parent=5 // pred_fallthru
        _
      %p1486 = scmp.le.s32.totalorder 2, %s27
      // Predicated region
      $region81: #{tpu_custom_call.1} parent=5 // pred_check
        %p1487 = pneg %p1486
      $region82: #{tpu_custom_call.1} parent=5 // pred_check_branch
        %1489 = sbr.rel (%p1487) target = $region84
      $region83: #{tpu_custom_call.1} parent=5 // pred_region
        %s1490 = ssub.s32 %s27, 2
        // Predicated region
        $region85: #{tpu_custom_call.1} parent=83 // pred_check
          %p1491 = pneg %p224
        $region86: #{tpu_custom_call.1} parent=83 // pred_check_branch
          %1493 = sbr.rel (%p1491) target = $region88
        $region87: #{tpu_custom_call.1} parent=83 // pred_region
          %s1494 = sand.u32 %s209, 1
          %s1495 = scalar_lea.sflag [#allocation5], %s1494
          %s1496 = sand.u32 %s209, 1
          %s1497 = smul.addr %s1496, 64
          %s1498 = scalar_lea.vmem [#allocation14], %s1497
          %1499 = dma.done %s1495, 1024
        $region88: #{tpu_custom_call.1} parent=83 // pred_fallthru
          _
      $region84: #{tpu_custom_call.1} parent=5 // pred_fallthru
        _
    $region6: #{tpu_custom_call.1} parent=1 // loop_footer
      %s31 = sadd.s32 1, %s27
    $region7: #{tpu_custom_call.1} parent=1 // loop_footer_branch
      %26 = sbr.rel target = $region3
    $region8: #{tpu_custom_call.1} parent=1 // loop_exit
      _
    %1500 = vsyncpa [#allocation4], 1
    %s1501 = scalar_lea.sflag [#allocation4], 1
    %1502 = vsyncpa %s1501, 1
    %1503 = vsyncpa [#allocation7], 1
    %s1504 = scalar_lea.sflag [#allocation7], 1
    %1505 = vsyncpa %s1504, 1
    %1506 = vsyncpa [#allocation10], 1
    %s1507 = scalar_lea.sflag [#allocation10], 1
    %1508 = vsyncpa %s1507, 1
    %1509 = vsyncpa [#allocation13], 1
    %s1510 = scalar_lea.sflag [#allocation13], 1
    %1511 = vsyncpa %s1510, 1
    %1512 = vsyncpa [#allocation5], 1
    %s1513 = scalar_lea.sflag [#allocation5], 1
    %1514 = vsyncpa %s1513, 1

</llo_original>
